<compile_context>
chip_gen: v6e
topology: v6e:2x2x1
jax: 0.10.0
libtpu: 0.0.40
codegen_flags: <defaults>
</compile_context>

<pallas_src>
import functools
import math

import jax
import jax.numpy as jnp
from jax.experimental import pallas as pl
from jax.experimental.pallas import tpu as pltpu


# ---------------------------------------------------------------------------
# VMEM budgeting / tile selection
# ---------------------------------------------------------------------------
@functools.lru_cache(maxsize=None)
def _vmem_budget():
    """Return (vmem_limit_bytes, double-buffered block budget), generation aware."""
    try:
        vmem = pltpu.get_tpu_info().vmem_capacity_bytes
    except Exception:                     # query unsupported -> conservative (v7x-safe) default
        vmem = None
    if vmem is not None and vmem >= 100 * 1024 * 1024:     # 128 MiB VMEM parts (v5e / v6e)
        return 96 * 1024 * 1024, 48 * 1024 * 1024
    return 32 * 1024 * 1024, 16 * 1024 * 1024              # v7x (64 MiB) / unknown


def _largest_aligned_divisor(dim, align, cap):
    """Largest multiple of `align` that divides `dim` and is <= cap, else None."""
    best = None
    t = align
    lim = min(dim, cap)
    while t <= lim:
        if dim % t == 0:
            best = t
        t += align
    return best


def _pick_tiles(m, n, itemsize, budget, *, allow_split_n=True):
    """Pick (tm, tn): lane-dense tn (multiple of 128), dtype-aligned tm, VMEM-budgeted,
    and >= 2 grid steps along splittable axes so both v7x TensorCores get work."""
    assert n % 128 == 0, n
    sub = max(8, 32 // itemsize)                  # sublane alignment: f32 -> 8, bf16 -> 16
    tn = _largest_aligned_divisor(n, 128, 2048) or n
    tm = _largest_aligned_divisor(m, sub, 1024) or m       # full dim is always legal

    def fits(tm_, tn_):
        blk = 3 * tm_ * tn_ * itemsize + 8 * tn_ * 4       # a, b, out blocks + coeff block
        return 2 * blk <= budget                            # double buffering

    while not fits(tm, tn):
        if tm % (2 * sub) == 0:
            tm //= 2
        elif tn % 256 == 0:
            tn //= 2
        elif tn > 128:
            tn = 128
        elif tm % sub == 0 and tm > sub:
            tm = sub
        else:
            break

    if (m // tm) * (n // tn) < 2:                 # ensure >= 2 grid steps when possible
        half_m = _largest_aligned_divisor(m, sub, m // 2)
        if half_m is not None:
            tm = half_m
        elif allow_split_n:
            half_n = _largest_aligned_divisor(n, 128, n // 2)
            if half_n is not None:
                tn = half_n
    return tm, tn


# ---------------------------------------------------------------------------
# Gate-coefficient collapse (exact): out = c0 + ca*a + cb*b + cab*(a*b)
# ---------------------------------------------------------------------------
def gate_coeffs(w):
    """w: (out, 16) logits.  Returns (8, out) f32: rows [c0, ca, cb, cab, 0, 0, 0, 0]."""
    p = jax.nn.softmax(w.astype(jnp.float32), axis=-1)            # (out, 16)
    c0 = p[:, 8] + p[:, 9] + p[:, 10] + p[:, 11] + p[:, 12] + p[:, 13] + p[:, 14] + p[:, 15]
    ca = p[:, 2] + p[:, 3] + p[:, 6] + p[:, 7] - p[:, 8] - p[:, 9] - p[:, 12] - p[:, 13]
    cb = p[:, 4] + p[:, 5] + p[:, 6] + p[:, 7] - p[:, 8] - p[:, 9] - p[:, 10] - p[:, 11]
    cab = (p[:, 1] - p[:, 2] - p[:, 4] - 2.0 * p[:, 6] - p[:, 7]
           + p[:, 8] + 2.0 * p[:, 9] + p[:, 11] + p[:, 13] - p[:, 14])
    z = jnp.zeros_like(c0)
    return jnp.stack([c0, ca, cb, cab, z, z, z, z], axis=0)       # (8, out)


# ---------------------------------------------------------------------------
# Pallas kernels
# ---------------------------------------------------------------------------
def _mix_kernel(a_ref, b_ref, c_ref, o_ref):
    """Collapsed difflogic gate mixture on a (tm, tn) tile; c_ref is (8, tn) coefficients."""
    a = a_ref[...].astype(jnp.float32)
    b = b_ref[...].astype(jnp.float32)
    c = c_ref[...]
    out = c[0:1, :] + c[1:2, :] * a + c[2:3, :] * b + c[3:4, :] * (a * b)
    o_ref[...] = out.astype(o_ref.dtype)


def _mix_group_sum_kernel(a_ref, b_ref, c_ref, g_ref, o_ref, *, inv_tau):
    """Final LogicLayer gate mix fused with GroupSum (128-lane-padded one-hot MXU reduction)."""
    @pl.when(pl.program_id(1) == 0)
    def _():
        o_ref[...] = jnp.zeros_like(o_ref)

    a = a_ref[...].astype(jnp.float32)
    b = b_ref[...].astype(jnp.float32)
    c = c_ref[...]
    y = c[0:1, :] + c[1:2, :] * a + c[2:3, :] * b + c[3:4, :] * (a * b)
    o_ref[...] += jnp.dot(
        y, g_ref[...], preferred_element_type=jnp.float32,
        precision=jax.lax.Precision.HIGHEST) * jnp.float32(inv_tau)


# ---------------------------------------------------------------------------
# Pallas wrappers
# ---------------------------------------------------------------------------
def logic_gate_mix(a, b, w):
    """a, b: (M, N); w: (N, 16) gate logits.  Returns (M, N) in a.dtype."""
    m, n = a.shape
    coeffs = gate_coeffs(w)                                       # (8, N) f32

    # Lane packing: fold spatial rows into the lane axis so the last dim is a multiple of 128.
    f = 1
    if n % 128 != 0:
        cand = 128 // math.gcd(128, n)
        if cand > 1 and m % cand == 0:
            f = cand
    if f > 1:
        a = a.reshape(m // f, f * n)
        b = b.reshape(m // f, f * n)
        coeffs = jnp.tile(coeffs, (1, f))                         # column j -> coeff[j % n]

    rows, cols = a.shape
    pad_n = (-cols) % 128                                         # fallback: zero-pad lanes
    pad_m = (-rows) % 8                                           # dense sublanes at tiny batch
    if pad_n or pad_m:
        a = jnp.pad(a, ((0, pad_m), (0, pad_n)))
        b = jnp.pad(b, ((0, pad_m), (0, pad_n)))
        coeffs = jnp.pad(coeffs, ((0, 0), (0, pad_n)))
    mp, np_ = rows + pad_m, cols + pad_n

    vmem_limit, budget = _vmem_budget()
    tm, tn = _pick_tiles(mp, np_, jnp.dtype(a.dtype).itemsize, budget)
    grid = (mp // tm, np_ // tn)

    y = pl.pallas_call(
        _mix_kernel,
        out_shape=jax.ShapeDtypeStruct((mp, np_), a.dtype),
        grid_spec=pltpu.PrefetchScalarGridSpec(
            num_scalar_prefetch=0,
            grid=grid,
            in_specs=[
                pl.BlockSpec((tm, tn), lambda i, j: (i, j)),
                pl.BlockSpec((tm, tn), lambda i, j: (i, j)),
                pl.BlockSpec((8, tn), lambda i, j: (0, j)),
            ],
            out_specs=pl.BlockSpec((tm, tn), lambda i, j: (i, j)),
        ),
        compiler_params=pltpu.CompilerParams(
            dimension_semantics=("parallel", "parallel"),
            vmem_limit_bytes=vmem_limit,
        ),
    )(a, b, coeffs)

    y = y[:rows, :cols]
    return y.reshape(m, n) if f > 1 else y


def logic_gate_mix_group_sum(a, b, w, k, tau):
    """Fused final layer: gate mix over (M, N) + GroupSum(k, tau) -> (M, k) f32."""
    m, n = a.shape
    assert n % k == 0
    group = n // k
    coeffs = gate_coeffs(w)                                       # (8, N)
    kp = 128                                                      # pad k=10 -> 128 lanes
    # one-hot grouping matrix (N, 128): column j (< k) sums the j-th contiguous group.
    g = (jnp.arange(n)[:, None] // group == jnp.arange(kp)[None, :]).astype(jnp.float32)

    pad_n = (-n) % 128
    pad_m = (-m) % 8
    if pad_n or pad_m:
        a = jnp.pad(a, ((0, pad_m), (0, pad_n)))
        b = jnp.pad(b, ((0, pad_m), (0, pad_n)))
        coeffs = jnp.pad(coeffs, ((0, 0), (0, pad_n)))            # zero coeffs -> y == 0 there
        g = jnp.pad(g, ((0, pad_n), (0, 0)))
    mp, np_ = m + pad_m, n + pad_n

    vmem_limit, budget = _vmem_budget()
    tm, tn = _pick_tiles(mp, np_, jnp.dtype(a.dtype).itemsize, budget, allow_split_n=False)
    grid = (mp // tm, np_ // tn)

    out = pl.pallas_call(
        functools.partial(_mix_group_sum_kernel, inv_tau=1.0 / float(tau)),
        out_shape=jax.ShapeDtypeStruct((mp, kp), jnp.float32),
        grid_spec=pltpu.PrefetchScalarGridSpec(
            num_scalar_prefetch=0,
            grid=grid,
            in_specs=[
                pl.BlockSpec((tm, tn), lambda i, j: (i, j)),
                pl.BlockSpec((tm, tn), lambda i, j: (i, j)),
                pl.BlockSpec((8, tn), lambda i, j: (0, j)),
                pl.BlockSpec((tn, kp), lambda i, j: (j, 0)),
            ],
            out_specs=pl.BlockSpec((tm, kp), lambda i, j: (i, 0)),
        ),
        compiler_params=pltpu.CompilerParams(
            dimension_semantics=("parallel", "arbitrary"),
            vmem_limit_bytes=vmem_limit,
        ),
    )(a, b, coeffs, g)
    return out[:m, :k]


# ---------------------------------------------------------------------------
# Pure-JAX references (full 16-term mixture), used for the sanity check
# ---------------------------------------------------------------------------
def _logic_gate_mix_ref(a, b, w):
    p = jax.nn.softmax(w.astype(jnp.float32), axis=-1).T          # (16, N)
    a = a.astype(jnp.float32)
    b = b.astype(jnp.float32)
    ab = a * b
    return (
        p[1] * ab + p[2] * (a - ab) + p[3] * a + p[4] * (b - ab) + p[5] * b
        + p[6] * (a + b - 2 * ab) + p[7] * (a + b - ab)
        + p[8] * (1 - (a + b - ab)) + p[9] * (1 - (a + b - 2 * ab))
        + p[10] * (1 - b) + p[11] * (1 - b + ab) + p[12] * (1 - a)
        + p[13] * (1 - a + ab) + p[14] * (1 - ab) + p[15]
    )


def _group_sum_ref(x, k, tau):
    b, n = x.shape
    return x.reshape(b, k, n // k).sum(-1) / tau


# ---------------------------------------------------------------------------
# Parameter init (deterministic, synthetic) and layer forwards
# ---------------------------------------------------------------------------
def _init_gate_weights(key, out_dim):
    w = 0.01 * jax.random.normal(key, (out_dim, 16), jnp.float32)
    # residual_init=True: bias the pass-through-'a' gate (op index 3).
    return w.at[:, 3].add(5.0)


def init_conv_logic_layer(key, in_c, out_c):
    ks = jax.random.split(key, 7)
    return dict(
        ca=jax.random.randint(ks[0], (out_c,), 0, in_c),
        dya=jax.random.randint(ks[1], (out_c,), 0, 3),
        dxa=jax.random.randint(ks[2], (out_c,), 0, 3),
        cb=jax.random.randint(ks[3], (out_c,), 0, in_c),
        dyb=jax.random.randint(ks[4], (out_c,), 0, 3),
        dxb=jax.random.randint(ks[5], (out_c,), 0, 3),
        w=_init_gate_weights(ks[6], out_c),
    )


def init_logic_layer(key, in_dim, out_dim):
    ks = jax.random.split(key, 3)
    return dict(
        ia=jax.random.randint(ks[0], (out_dim,), 0, in_dim),
        ib=jax.random.randint(ks[1], (out_dim,), 0, in_dim),
        w=_init_gate_weights(ks[2], out_dim),
    )


def conv_logic_forward(params, x, mix_fn):
    """x: NHWC (B, H, W, C).  3x3 receptive field, padding=1, then 2x2 or-pooling (max)."""
    b, h, w, _ = x.shape
    out_c = params["w"].shape[0]
    xpad = jnp.pad(x, ((0, 0), (1, 1), (1, 1), (0, 0)))

    def gather(cc, dy, dx):
        yidx = jnp.arange(h)[:, None, None] + dy[None, None, :]   # (H, 1, Oc)
        xidx = jnp.arange(w)[None, :, None] + dx[None, None, :]   # (1, W, Oc)
        cidx = cc[None, None, :]                                  # (1, 1, Oc)
        return xpad[:, yidx, xidx, cidx]                          # (B, H, W, Oc)

    a = gather(params["ca"], params["dya"], params["dxa"]).reshape(b * h * w, out_c)
    bb = gather(params["cb"], params["dyb"], params["dxb"]).reshape(b * h * w, out_c)
    y = mix_fn(a, bb, params["w"]).reshape(b, h, w, out_c)
    # or-pooling over 2x2 windows (real-valued OR ~ max), stride 2
    return y.reshape(b, h // 2, 2, w // 2, 2, out_c).max(axis=(2, 4))


def logic_layer_forward(params, x, mix_fn):
    return mix_fn(x[:, params["ia"]], x[:, params["ib"]], params["w"])


# ---------------------------------------------------------------------------
# Full model
# ---------------------------------------------------------------------------
def init_model(key, k_param=4, input_channels=3, input_size=16):
    channels = [input_channels, k_param, 4 * k_param, 16 * k_param, 32 * k_param]
    num_blocks = len(channels) - 1
    extra_layers = 2 if k_param >= 1024 else 1
    reduced = input_size // 2 ** num_blocks
    flat = channels[-1] * reduced * reduced
    fc_dims = [flat, extra_layers * flat * 10, extra_layers * flat * 5,
               extra_layers * (flat * 10) // 4]

    keys = jax.random.split(key, num_blocks + len(fc_dims) - 1)
    conv_params = [init_conv_logic_layer(keys[i], channels[i], channels[i + 1])
                   for i in range(num_blocks)]
    fc_params = [init_logic_layer(keys[num_blocks + i], fc_dims[i], fc_dims[i + 1])
                 for i in range(len(fc_dims) - 1)]
    return dict(conv=conv_params, fc=fc_params)


def model_forward(params, x_nchw, *, k=10, tau=20, use_pallas=True, act_dtype=jnp.bfloat16):
    # act_dtype=jnp.bfloat16 halves HBM traffic on these bandwidth-bound layers; the kernels
    # compute in f32 internally.  Use act_dtype=jnp.float32 for exact parity with the reference.
    mix_fn = logic_gate_mix if use_pallas else _logic_gate_mix_ref
    x = jnp.transpose(x_nchw, (0, 2, 3, 1)).astype(act_dtype)     # NCHW -> NHWC
    for cp in params["conv"]:
        x = conv_logic_forward(cp, x, mix_fn)
    # match nn.Flatten() on an NCHW tensor: back to NCHW then flatten C,H,W
    b = x.shape[0]
    x = jnp.transpose(x, (0, 3, 1, 2)).reshape(b, -1)
    for fp in params["fc"][:-1]:
        x = logic_layer_forward(fp, x, mix_fn)
    last = params["fc"][-1]
    a = x[:, last["ia"]]
    bb = x[:, last["ib"]]
    if use_pallas:
        return logic_gate_mix_group_sum(a, bb, last["w"], k, tau)
    y = _logic_gate_mix_ref(a, bb, last["w"])
    return _group_sum_ref(y, k, tau)


if __name__ == "__main__":
    key = jax.random.PRNGKey(0)
    k_model, k_x = jax.random.split(key)

    # Small config consistent with the module: k_param=4, 3x16x16 input, batch=2.
    params = init_model(k_model, k_param=4, input_channels=3, input_size=16)
    x = jax.random.uniform(k_x, (2, 3, 16, 16), jnp.float32)      # NCHW, values in [0, 1]

    fwd_bf16 = jax.jit(functools.partial(model_forward, use_pallas=True,
                                         act_dtype=jnp.bfloat16))
    fwd_f32 = jax.jit(functools.partial(model_forward, use_pallas=True,
                                        act_dtype=jnp.float32))
    ref_f32 = jax.jit(functools.partial(model_forward, use_pallas=False,
                                        act_dtype=jnp.float32))

    out = jax.block_until_ready(fwd_bf16(params, x))              # default bf16-I/O path
    out32 = jax.block_until_ready(fwd_f32(params, x))             # exact-parity path
    ref = jax.block_until_ready(ref_f32(params, x))

    assert out.shape == (2, 10) and out32.shape == (2, 10), (out.shape, out32.shape)
    assert jnp.all(jnp.isfinite(out)) and jnp.all(jnp.isfinite(out32))
    assert jnp.allclose(out32, ref, atol=1e-4, rtol=1e-4), (out32, ref)
    assert jnp.allclose(out.astype(jnp.float32), ref, atol=1e-1, rtol=1e-1), (out, ref)
    print("KERNEL_OK")
</pallas_src>

<mosaic_0001>
module attributes {stable_mosaic.version = 11 : i64} {
  func.func @_mix_kernel(%arg0: i32, %arg1: i32, %arg2: memref<16x128xbf16, #tpu.memory_space<vmem>>, %arg3: memref<16x128xbf16, #tpu.memory_space<vmem>>, %arg4: memref<8x128xf32, #tpu.memory_space<vmem>>, %arg5: memref<16x128xbf16, #tpu.memory_space<vmem>>) attributes {dimension_semantics = [#tpu.dimension_semantics<parallel>, #tpu.dimension_semantics<parallel>], iteration_bounds = array<i64: 1, 1>, scalar_prefetch = 0 : i64, scratch_operands = 0 : i64, tpu.core_type = #tpu.core_type<tc>, window_params = [{transform_indices = @transform_0, window_bounds = array<i64: 16, 128>}, {transform_indices = @transform_1, window_bounds = array<i64: 16, 128>}, {transform_indices = @transform_2, window_bounds = array<i64: 8, 128>}, {transform_indices = @transform_3, window_bounds = array<i64: 16, 128>}]} {
    %c0 = arith.constant 0 : index
    %c0_0 = arith.constant 0 : index
    %0 = vector.load %arg2[%c0, %c0_0] : memref<16x128xbf16, #tpu.memory_space<vmem>>, vector<16x128xbf16>
    %1 = arith.extf %0 : vector<16x128xbf16> to vector<16x128xf32>
    %c0_1 = arith.constant 0 : index
    %c0_2 = arith.constant 0 : index
    %2 = vector.load %arg3[%c0_1, %c0_2] : memref<16x128xbf16, #tpu.memory_space<vmem>>, vector<16x128xbf16>
    %3 = arith.extf %2 : vector<16x128xbf16> to vector<16x128xf32>
    %c0_3 = arith.constant 0 : index
    %c0_4 = arith.constant 0 : index
    %4 = vector.load %arg4[%c0_3, %c0_4] : memref<8x128xf32, #tpu.memory_space<vmem>>, vector<8x128xf32>
    %5 = vector.extract_strided_slice %4 {offsets = [0, 0], sizes = [1, 128], strides = [1, 1]} : vector<8x128xf32> to vector<1x128xf32>
    %6 = vector.extract_strided_slice %4 {offsets = [1, 0], sizes = [1, 128], strides = [1, 1]} : vector<8x128xf32> to vector<1x128xf32>
    %7 = vector.broadcast %6 : vector<1x128xf32> to vector<16x128xf32>
    %8 = arith.mulf %7, %1 : vector<16x128xf32>
    %9 = vector.broadcast %5 : vector<1x128xf32> to vector<16x128xf32>
    %10 = arith.addf %9, %8 : vector<16x128xf32>
    %11 = vector.extract_strided_slice %4 {offsets = [2, 0], sizes = [1, 128], strides = [1, 1]} : vector<8x128xf32> to vector<1x128xf32>
    %12 = vector.broadcast %11 : vector<1x128xf32> to vector<16x128xf32>
    %13 = arith.mulf %12, %3 : vector<16x128xf32>
    %14 = arith.addf %10, %13 : vector<16x128xf32>
    %15 = vector.extract_strided_slice %4 {offsets = [3, 0], sizes = [1, 128], strides = [1, 1]} : vector<8x128xf32> to vector<1x128xf32>
    %16 = arith.mulf %1, %3 : vector<16x128xf32>
    %17 = vector.broadcast %15 : vector<1x128xf32> to vector<16x128xf32>
    %18 = arith.mulf %17, %16 : vector<16x128xf32>
    %19 = arith.addf %14, %18 : vector<16x128xf32>
    %20 = arith.truncf %19 : vector<16x128xf32> to vector<16x128xbf16>
    %c0_5 = arith.constant 0 : index
    %c0_6 = arith.constant 0 : index
    %21 = vector.load %arg5[%c0_5, %c0_6] : memref<16x128xbf16, #tpu.memory_space<vmem>>, vector<16x128xbf16>
    tpu.vector_store %arg5[%c0_5, %c0_6], %20 {strides = array<i32>} : memref<16x128xbf16, #tpu.memory_space<vmem>>, vector<16x128xbf16>,
    return
  }
  func.func @transform_0(%arg0: i32, %arg1: i32) -> (i32, i32) {
    %c0_i32 = arith.constant 0 : i32
    return %arg0, %arg1 : i32, i32
  }
  func.func @transform_1(%arg0: i32, %arg1: i32) -> (i32, i32) {
    %c0_i32 = arith.constant 0 : i32
    return %arg0, %arg1 : i32, i32
  }
  func.func @transform_2(%arg0: i32, %arg1: i32) -> (i32, i32) {
    %c0_i32 = arith.constant 0 : i32
    %c0_i32_0 = arith.constant 0 : i32
    return %c0_i32, %arg1 : i32, i32
  }
  func.func @transform_3(%arg0: i32, %arg1: i32) -> (i32, i32) {
    %c0_i32 = arith.constant 0 : i32
    return %arg0, %arg1 : i32, i32
  }
}

module attributes {stable_mosaic.version = 11 : i64} {
  func.func @_mix_kernel(%arg0: i32, %arg1: i32, %arg2: memref<8x128xbf16, #tpu.memory_space<vmem>>, %arg3: memref<8x128xbf16, #tpu.memory_space<vmem>>, %arg4: memref<8x128xf32, #tpu.memory_space<vmem>>, %arg5: memref<8x128xbf16, #tpu.memory_space<vmem>>) attributes {dimension_semantics = [#tpu.dimension_semantics<parallel>, #tpu.dimension_semantics<parallel>], iteration_bounds = array<i64: 1, 1>, scalar_prefetch = 0 : i64, scratch_operands = 0 : i64, tpu.core_type = #tpu.core_type<tc>, window_params = [{transform_indices = @transform_0, window_bounds = array<i64: 8, 128>}, {transform_indices = @transform_1, window_bounds = array<i64: 8, 128>}, {transform_indices = @transform_2, window_bounds = array<i64: 8, 128>}, {transform_indices = @transform_3, window_bounds = array<i64: 8, 128>}]} {
    %c0 = arith.constant 0 : index
    %c0_0 = arith.constant 0 : index
    %0 = vector.load %arg2[%c0, %c0_0] : memref<8x128xbf16, #tpu.memory_space<vmem>>, vector<8x128xbf16>
    %1 = arith.extf %0 : vector<8x128xbf16> to vector<8x128xf32>
    %c0_1 = arith.constant 0 : index
    %c0_2 = arith.constant 0 : index
    %2 = vector.load %arg3[%c0_1, %c0_2] : memref<8x128xbf16, #tpu.memory_space<vmem>>, vector<8x128xbf16>
    %3 = arith.extf %2 : vector<8x128xbf16> to vector<8x128xf32>
    %c0_3 = arith.constant 0 : index
    %c0_4 = arith.constant 0 : index
    %4 = vector.load %arg4[%c0_3, %c0_4] : memref<8x128xf32, #tpu.memory_space<vmem>>, vector<8x128xf32>
    %5 = vector.extract_strided_slice %4 {offsets = [0, 0], sizes = [1, 128], strides = [1, 1]} : vector<8x128xf32> to vector<1x128xf32>
    %6 = vector.extract_strided_slice %4 {offsets = [1, 0], sizes = [1, 128], strides = [1, 1]} : vector<8x128xf32> to vector<1x128xf32>
    %7 = vector.broadcast %6 : vector<1x128xf32> to vector<8x128xf32>
    %8 = arith.mulf %7, %1 : vector<8x128xf32>
    %9 = vector.broadcast %5 : vector<1x128xf32> to vector<8x128xf32>
    %10 = arith.addf %9, %8 : vector<8x128xf32>
    %11 = vector.extract_strided_slice %4 {offsets = [2, 0], sizes = [1, 128], strides = [1, 1]} : vector<8x128xf32> to vector<1x128xf32>
    %12 = vector.broadcast %11 : vector<1x128xf32> to vector<8x128xf32>
    %13 = arith.mulf %12, %3 : vector<8x128xf32>
    %14 = arith.addf %10, %13 : vector<8x128xf32>
    %15 = vector.extract_strided_slice %4 {offsets = [3, 0], sizes = [1, 128], strides = [1, 1]} : vector<8x128xf32> to vector<1x128xf32>
    %16 = arith.mulf %1, %3 : vector<8x128xf32>
    %17 = vector.broadcast %15 : vector<1x128xf32> to vector<8x128xf32>
    %18 = arith.mulf %17, %16 : vector<8x128xf32>
    %19 = arith.addf %14, %18 : vector<8x128xf32>
    %20 = arith.truncf %19 : vector<8x128xf32> to vector<8x128xbf16>
    %c0_5 = arith.constant 0 : index
    %c0_6 = arith.constant 0 : index
    %21 = vector.load %arg5[%c0_5, %c0_6] : memref<8x128xbf16, #tpu.memory_space<vmem>>, vector<8x128xbf16>
    tpu.vector_store %arg5[%c0_5, %c0_6], %20 {strides = array<i32>} : memref<8x128xbf16, #tpu.memory_space<vmem>>, vector<8x128xbf16>,
    return
  }
  func.func @transform_0(%arg0: i32, %arg1: i32) -> (i32, i32) {
    %c0_i32 = arith.constant 0 : i32
    return %arg0, %arg1 : i32, i32
  }
  func.func @transform_1(%arg0: i32, %arg1: i32) -> (i32, i32) {
    %c0_i32 = arith.constant 0 : i32
    return %arg0, %arg1 : i32, i32
  }
  func.func @transform_2(%arg0: i32, %arg1: i32) -> (i32, i32) {
    %c0_i32 = arith.constant 0 : i32
    %c0_i32_0 = arith.constant 0 : i32
    return %c0_i32, %arg1 : i32, i32
  }
  func.func @transform_3(%arg0: i32, %arg1: i32) -> (i32, i32) {
    %c0_i32 = arith.constant 0 : i32
    return %arg0, %arg1 : i32, i32
  }
}

module attributes {stable_mosaic.version = 11 : i64} {
  func.func @_mix_kernel(%arg0: i32, %arg1: i32, %arg2: memref<8x640xbf16, #tpu.memory_space<vmem>>, %arg3: memref<8x640xbf16, #tpu.memory_space<vmem>>, %arg4: memref<8x640xf32, #tpu.memory_space<vmem>>, %arg5: memref<8x640xbf16, #tpu.memory_space<vmem>>) attributes {dimension_semantics = [#tpu.dimension_semantics<parallel>, #tpu.dimension_semantics<parallel>], iteration_bounds = array<i64: 1, 2>, scalar_prefetch = 0 : i64, scratch_operands = 0 : i64, tpu.core_type = #tpu.core_type<tc>, window_params = [{transform_indices = @transform_0, window_bounds = array<i64: 8, 640>}, {transform_indices = @transform_1, window_bounds = array<i64: 8, 640>}, {transform_indices = @transform_2, window_bounds = array<i64: 8, 640>}, {transform_indices = @transform_3, window_bounds = array<i64: 8, 640>}]} {
    %c0 = arith.constant 0 : index
    %c0_0 = arith.constant 0 : index
    %0 = vector.load %arg2[%c0, %c0_0] : memref<8x640xbf16, #tpu.memory_space<vmem>>, vector<8x640xbf16>
    %1 = arith.extf %0 : vector<8x640xbf16> to vector<8x640xf32>
    %c0_1 = arith.constant 0 : index
    %c0_2 = arith.constant 0 : index
    %2 = vector.load %arg3[%c0_1, %c0_2] : memref<8x640xbf16, #tpu.memory_space<vmem>>, vector<8x640xbf16>
    %3 = arith.extf %2 : vector<8x640xbf16> to vector<8x640xf32>
    %c0_3 = arith.constant 0 : index
    %c0_4 = arith.constant 0 : index
    %4 = vector.load %arg4[%c0_3, %c0_4] : memref<8x640xf32, #tpu.memory_space<vmem>>, vector<8x640xf32>
    %5 = vector.extract_strided_slice %4 {offsets = [0, 0], sizes = [1, 640], strides = [1, 1]} : vector<8x640xf32> to vector<1x640xf32>
    %6 = vector.extract_strided_slice %4 {offsets = [1, 0], sizes = [1, 640], strides = [1, 1]} : vector<8x640xf32> to vector<1x640xf32>
    %7 = vector.broadcast %6 : vector<1x640xf32> to vector<8x640xf32>
    %8 = arith.mulf %7, %1 : vector<8x640xf32>
    %9 = vector.broadcast %5 : vector<1x640xf32> to vector<8x640xf32>
    %10 = arith.addf %9, %8 : vector<8x640xf32>
    %11 = vector.extract_strided_slice %4 {offsets = [2, 0], sizes = [1, 640], strides = [1, 1]} : vector<8x640xf32> to vector<1x640xf32>
    %12 = vector.broadcast %11 : vector<1x640xf32> to vector<8x640xf32>
    %13 = arith.mulf %12, %3 : vector<8x640xf32>
    %14 = arith.addf %10, %13 : vector<8x640xf32>
    %15 = vector.extract_strided_slice %4 {offsets = [3, 0], sizes = [1, 640], strides = [1, 1]} : vector<8x640xf32> to vector<1x640xf32>
    %16 = arith.mulf %1, %3 : vector<8x640xf32>
    %17 = vector.broadcast %15 : vector<1x640xf32> to vector<8x640xf32>
    %18 = arith.mulf %17, %16 : vector<8x640xf32>
    %19 = arith.addf %14, %18 : vector<8x640xf32>
    %20 = arith.truncf %19 : vector<8x640xf32> to vector<8x640xbf16>
    %c0_5 = arith.constant 0 : index
    %c0_6 = arith.constant 0 : index
    %21 = vector.load %arg5[%c0_5, %c0_6] : memref<8x640xbf16, #tpu.memory_space<vmem>>, vector<8x640xbf16>
    tpu.vector_store %arg5[%c0_5, %c0_6], %20 {strides = array<i32>} : memref<8x640xbf16, #tpu.memory_space<vmem>>, vector<8x640xbf16>,
    return
  }
  func.func @transform_0(%arg0: i32, %arg1: i32) -> (i32, i32) {
    %c0_i32 = arith.constant 0 : i32
    return %arg0, %arg1 : i32, i32
  }
  func.func @transform_1(%arg0: i32, %arg1: i32) -> (i32, i32) {
    %c0_i32 = arith.constant 0 : i32
    return %arg0, %arg1 : i32, i32
  }
  func.func @transform_2(%arg0: i32, %arg1: i32) -> (i32, i32) {
    %c0_i32 = arith.constant 0 : i32
    %c0_i32_0 = arith.constant 0 : i32
    return %c0_i32, %arg1 : i32, i32
  }
  func.func @transform_3(%arg0: i32, %arg1: i32) -> (i32, i32) {
    %c0_i32 = arith.constant 0 : i32
    return %arg0, %arg1 : i32, i32
  }
}

module attributes {stable_mosaic.version = 11 : i64} {
  func.func @_mix_kernel(%arg0: i32, %arg1: i32, %arg2: memref<8x128xbf16, #tpu.memory_space<vmem>>, %arg3: memref<8x128xbf16, #tpu.memory_space<vmem>>, %arg4: memref<8x128xf32, #tpu.memory_space<vmem>>, %arg5: memref<8x128xbf16, #tpu.memory_space<vmem>>) attributes {dimension_semantics = [#tpu.dimension_semantics<parallel>, #tpu.dimension_semantics<parallel>], iteration_bounds = array<i64: 1, 5>, scalar_prefetch = 0 : i64, scratch_operands = 0 : i64, tpu.core_type = #tpu.core_type<tc>, window_params = [{transform_indices = @transform_0, window_bounds = array<i64: 8, 128>}, {transform_indices = @transform_1, window_bounds = array<i64: 8, 128>}, {transform_indices = @transform_2, window_bounds = array<i64: 8, 128>}, {transform_indices = @transform_3, window_bounds = array<i64: 8, 128>}]} {
    %c0 = arith.constant 0 : index
    %c0_0 = arith.constant 0 : index
    %0 = vector.load %arg2[%c0, %c0_0] : memref<8x128xbf16, #tpu.memory_space<vmem>>, vector<8x128xbf16>
    %1 = arith.extf %0 : vector<8x128xbf16> to vector<8x128xf32>
    %c0_1 = arith.constant 0 : index
    %c0_2 = arith.constant 0 : index
    %2 = vector.load %arg3[%c0_1, %c0_2] : memref<8x128xbf16, #tpu.memory_space<vmem>>, vector<8x128xbf16>
    %3 = arith.extf %2 : vector<8x128xbf16> to vector<8x128xf32>
    %c0_3 = arith.constant 0 : index
    %c0_4 = arith.constant 0 : index
    %4 = vector.load %arg4[%c0_3, %c0_4] : memref<8x128xf32, #tpu.memory_space<vmem>>, vector<8x128xf32>
    %5 = vector.extract_strided_slice %4 {offsets = [0, 0], sizes = [1, 128], strides = [1, 1]} : vector<8x128xf32> to vector<1x128xf32>
    %6 = vector.extract_strided_slice %4 {offsets = [1, 0], sizes = [1, 128], strides = [1, 1]} : vector<8x128xf32> to vector<1x128xf32>
    %7 = vector.broadcast %6 : vector<1x128xf32> to vector<8x128xf32>
    %8 = arith.mulf %7, %1 : vector<8x128xf32>
    %9 = vector.broadcast %5 : vector<1x128xf32> to vector<8x128xf32>
    %10 = arith.addf %9, %8 : vector<8x128xf32>
    %11 = vector.extract_strided_slice %4 {offsets = [2, 0], sizes = [1, 128], strides = [1, 1]} : vector<8x128xf32> to vector<1x128xf32>
    %12 = vector.broadcast %11 : vector<1x128xf32> to vector<8x128xf32>
    %13 = arith.mulf %12, %3 : vector<8x128xf32>
    %14 = arith.addf %10, %13 : vector<8x128xf32>
    %15 = vector.extract_strided_slice %4 {offsets = [3, 0], sizes = [1, 128], strides = [1, 1]} : vector<8x128xf32> to vector<1x128xf32>
    %16 = arith.mulf %1, %3 : vector<8x128xf32>
    %17 = vector.broadcast %15 : vector<1x128xf32> to vector<8x128xf32>
    %18 = arith.mulf %17, %16 : vector<8x128xf32>
    %19 = arith.addf %14, %18 : vector<8x128xf32>
    %20 = arith.truncf %19 : vector<8x128xf32> to vector<8x128xbf16>
    %c0_5 = arith.constant 0 : index
    %c0_6 = arith.constant 0 : index
    %21 = vector.load %arg5[%c0_5, %c0_6] : memref<8x128xbf16, #tpu.memory_space<vmem>>, vector<8x128xbf16>
    tpu.vector_store %arg5[%c0_5, %c0_6], %20 {strides = array<i32>} : memref<8x128xbf16, #tpu.memory_space<vmem>>, vector<8x128xbf16>,
    return
  }
  func.func @transform_0(%arg0: i32, %arg1: i32) -> (i32, i32) {
    %c0_i32 = arith.constant 0 : i32
    return %arg0, %arg1 : i32, i32
  }
  func.func @transform_1(%arg0: i32, %arg1: i32) -> (i32, i32) {
    %c0_i32 = arith.constant 0 : i32
    return %arg0, %arg1 : i32, i32
  }
  func.func @transform_2(%arg0: i32, %arg1: i32) -> (i32, i32) {
    %c0_i32 = arith.constant 0 : i32
    %c0_i32_0 = arith.constant 0 : i32
    return %c0_i32, %arg1 : i32, i32
  }
  func.func @transform_3(%arg0: i32, %arg1: i32) -> (i32, i32) {
    %c0_i32 = arith.constant 0 : i32
    return %arg0, %arg1 : i32, i32
  }
}

module attributes {stable_mosaic.version = 11 : i64} {
  func.func @_mix_group_sum_kernel(%arg0: i32, %arg1: i32, %arg2: memref<8x384xbf16, #tpu.memory_space<vmem>>, %arg3: memref<8x384xbf16, #tpu.memory_space<vmem>>, %arg4: memref<8x384xf32, #tpu.memory_space<vmem>>, %arg5: memref<384x128xf32, #tpu.memory_space<vmem>>, %arg6: memref<8x128xf32, #tpu.memory_space<vmem>>) attributes {dimension_semantics = [#tpu.dimension_semantics<parallel>, #tpu.dimension_semantics<arbitrary>], iteration_bounds = array<i64: 1, 1>, scalar_prefetch = 0 : i64, scratch_operands = 0 : i64, tpu.core_type = #tpu.core_type<tc>, window_params = [{transform_indices = @transform_0, window_bounds = array<i64: 8, 384>}, {transform_indices = @transform_1, window_bounds = array<i64: 8, 384>}, {transform_indices = @transform_2, window_bounds = array<i64: 8, 384>}, {transform_indices = @transform_3, window_bounds = array<i64: 384, 128>}, {transform_indices = @transform_4, window_bounds = array<i64: 8, 128>}]} {
    %c0_i32 = arith.constant 0 : i32
    %0 = arith.cmpi eq, %arg1, %c0_i32 : i32
    %1 = arith.extui %0 : i1 to i32
    %c0_i32_0 = arith.constant 0 : i32
    %2 = arith.cmpi ne, %1, %c0_i32_0 : i32
    scf.if %2 {
      %cst_13 = arith.constant 0.000000e+00 : f32
      %30 = vector.broadcast %cst_13 : f32 to vector<8x128xf32>
      %c0_14 = arith.constant 0 : index
      %c0_15 = arith.constant 0 : index
      %31 = vector.load %arg6[%c0_14, %c0_15] : memref<8x128xf32, #tpu.memory_space<vmem>>, vector<8x128xf32>
      tpu.vector_store %arg6[%c0_14, %c0_15], %30 {strides = array<i32>} : memref<8x128xf32, #tpu.memory_space<vmem>>, vector<8x128xf32>,
    } else {
    }
    %c0 = arith.constant 0 : index
    %c0_1 = arith.constant 0 : index
    %3 = vector.load %arg2[%c0, %c0_1] : memref<8x384xbf16, #tpu.memory_space<vmem>>, vector<8x384xbf16>
    %4 = arith.extf %3 : vector<8x384xbf16> to vector<8x384xf32>
    %c0_2 = arith.constant 0 : index
    %c0_3 = arith.constant 0 : index
    %5 = vector.load %arg3[%c0_2, %c0_3] : memref<8x384xbf16, #tpu.memory_space<vmem>>, vector<8x384xbf16>
    %6 = arith.extf %5 : vector<8x384xbf16> to vector<8x384xf32>
    %c0_4 = arith.constant 0 : index
    %c0_5 = arith.constant 0 : index
    %7 = vector.load %arg4[%c0_4, %c0_5] : memref<8x384xf32, #tpu.memory_space<vmem>>, vector<8x384xf32>
    %8 = vector.extract_strided_slice %7 {offsets = [0, 0], sizes = [1, 384], strides = [1, 1]} : vector<8x384xf32> to vector<1x384xf32>
    %9 = vector.extract_strided_slice %7 {offsets = [1, 0], sizes = [1, 384], strides = [1, 1]} : vector<8x384xf32> to vector<1x384xf32>
    %10 = vector.broadcast %9 : vector<1x384xf32> to vector<8x384xf32>
    %11 = arith.mulf %10, %4 : vector<8x384xf32>
    %12 = vector.broadcast %8 : vector<1x384xf32> to vector<8x384xf32>
    %13 = arith.addf %12, %11 : vector<8x384xf32>
    %14 = vector.extract_strided_slice %7 {offsets = [2, 0], sizes = [1, 384], strides = [1, 1]} : vector<8x384xf32> to vector<1x384xf32>
    %15 = vector.broadcast %14 : vector<1x384xf32> to vector<8x384xf32>
    %16 = arith.mulf %15, %6 : vector<8x384xf32>
    %17 = arith.addf %13, %16 : vector<8x384xf32>
    %18 = vector.extract_strided_slice %7 {offsets = [3, 0], sizes = [1, 384], strides = [1, 1]} : vector<8x384xf32> to vector<1x384xf32>
    %19 = arith.mulf %4, %6 : vector<8x384xf32>
    %20 = vector.broadcast %18 : vector<1x384xf32> to vector<8x384xf32>
    %21 = arith.mulf %20, %19 : vector<8x384xf32>
    %22 = arith.addf %17, %21 : vector<8x384xf32>
    %c0_6 = arith.constant 0 : index
    %c0_7 = arith.constant 0 : index
    %23 = vector.load %arg6[%c0_6, %c0_7] : memref<8x128xf32, #tpu.memory_space<vmem>>, vector<8x128xf32>
    %c0_8 = arith.constant 0 : index
    %c0_9 = arith.constant 0 : index
    %24 = vector.load %arg5[%c0_8, %c0_9] : memref<384x128xf32, #tpu.memory_space<vmem>>, vector<384x128xf32>
    %cst = arith.constant dense<0.000000e+00> : vector<8x128xf32>
    %25 = tpu.matmul %22, %24, %cst {dimension_numbers = #tpu.dot_dimension_numbers<[1], [0], [0], [1], [0, 0, 1, 1], [], []>, precision = #tpu.contract_precision<fp32>} : vector<8x384xf32>, vector<384x128xf32>, vector<8x128xf32> -> vector<8x128xf32>
    %cst_10 = arith.constant 5.000000e-02 : f32
    %26 = vector.broadcast %cst_10 : f32 to vector<8x128xf32>
    %27 = arith.mulf %25, %26 : vector<8x128xf32>
    %28 = arith.addf %23, %27 : vector<8x128xf32>
    %c0_11 = arith.constant 0 : index
    %c0_12 = arith.constant 0 : index
    %29 = vector.load %arg6[%c0_11, %c0_12] : memref<8x128xf32, #tpu.memory_space<vmem>>, vector<8x128xf32>
    tpu.vector_store %arg6[%c0_11, %c0_12], %28 {strides = array<i32>} : memref<8x128xf32, #tpu.memory_space<vmem>>, vector<8x128xf32>,
    return
  }
  func.func @transform_0(%arg0: i32, %arg1: i32) -> (i32, i32) {
    %c0_i32 = arith.constant 0 : i32
    return %arg0, %arg1 : i32, i32
  }
  func.func @transform_1(%arg0: i32, %arg1: i32) -> (i32, i32) {
    %c0_i32 = arith.constant 0 : i32
    return %arg0, %arg1 : i32, i32
  }
  func.func @transform_2(%arg0: i32, %arg1: i32) -> (i32, i32) {
    %c0_i32 = arith.constant 0 : i32
    %c0_i32_0 = arith.constant 0 : i32
    return %c0_i32, %arg1 : i32, i32
  }
  func.func @transform_3(%arg0: i32, %arg1: i32) -> (i32, i32) {
    %c0_i32 = arith.constant 0 : i32
    %c0_i32_0 = arith.constant 0 : i32
    return %arg1, %c0_i32 : i32, i32
  }
  func.func @transform_4(%arg0: i32, %arg1: i32) -> (i32, i32) {
    %c0_i32 = arith.constant 0 : i32
    %c0_i32_0 = arith.constant 0 : i32
    return %arg0, %c0_i32 : i32, i32
  }
}

</mosaic_0001>

<llo_original>
// kernel: tile.24
$region0: #{tile.24}
  %s0 = inlined_call_operand.vmem [shape: f32[8,8,16], index: 0, kind: input, shape index: {}]
  %s1 = inlined_call_operand.vmem [shape: f32[8,128], index: 1, kind: output, shape index: {}]
  %v2 = vld [vmem:[%s0] ss:$8 sm:$0xf]
  %v3 = vld [vmem:[%s0] ss:$8 sm:$0xf0]
  %vm4 = vcmask 1047556
  %v5 = vsel %vm4, %v3, %v2
  %vm6 = vcmask 130048
  %7 = vst.msk [vmem:[%s1] sm:$0xff] %vm6, %v5
  %s8 = scalar_lea.vmem %s0, 7
  %v9 = vld [vmem:[%s8] ss:$8 sm:$0xf]
  %s10 = scalar_lea.vmem %s0, 7
  %v11 = vld [vmem:[%s10] ss:$8 sm:$0xf0]
  %vm12 = vcmask 1047556
  %v13 = vsel %vm12, %v11, %v9
  %14 = vrot.lane.b32.xlu0 %v13, 112
  %v15 = vpop.permute.xlu0 %14
  %vm16 = vcmask 1048448
  %17 = vst.msk [vmem:[%s1] sm:$0xff] %vm16, %v15
  %s18 = scalar_lea.vmem %s0, 6
  %v19 = vld [vmem:[%s18] ss:$8 sm:$0xf]
  %s20 = scalar_lea.vmem %s0, 6
  %v21 = vld [vmem:[%s20] ss:$8 sm:$0xf0]
  %vm22 = vcmask 1047556
  %v23 = vsel %vm22, %v21, %v19
  %24 = vrot.lane.b32.xlu0 %v23, 96
  %v25 = vpop.permute.xlu0 %24
  %vm26 = vcmask 917248
  %27 = vst.msk [vmem:[%s1] sm:$0xff] %vm26, %v25
  %s28 = scalar_lea.vmem %s0, 5
  %v29 = vld [vmem:[%s28] ss:$8 sm:$0xf]
  %s30 = scalar_lea.vmem %s0, 5
  %v31 = vld [vmem:[%s30] ss:$8 sm:$0xf0]
  %vm32 = vcmask 1047556
  %v33 = vsel %vm32, %v31, %v29
  %34 = vrot.lane.b32.xlu0 %v33, 80
  %v35 = vpop.permute.xlu0 %34
  %vm36 = vcmask 786048
  %37 = vst.msk [vmem:[%s1] sm:$0xff] %vm36, %v35
  %s38 = scalar_lea.vmem %s0, 4
  %v39 = vld [vmem:[%s38] ss:$8 sm:$0xf]
  %s40 = scalar_lea.vmem %s0, 4
  %v41 = vld [vmem:[%s40] ss:$8 sm:$0xf0]
  %vm42 = vcmask 1047556
  %v43 = vsel %vm42, %v41, %v39
  %44 = vrot.lane.b32.xlu0 %v43, 64
  %v45 = vpop.permute.xlu0 %44
  %vm46 = vcmask 654848
  %47 = vst.msk [vmem:[%s1] sm:$0xff] %vm46, %v45
  %s48 = scalar_lea.vmem %s0, 3
  %v49 = vld [vmem:[%s48] ss:$8 sm:$0xf]
  %s50 = scalar_lea.vmem %s0, 3
  %v51 = vld [vmem:[%s50] ss:$8 sm:$0xf0]
  %vm52 = vcmask 1047556
  %v53 = vsel %vm52, %v51, %v49
  %54 = vrot.lane.b32.xlu0 %v53, 48
  %v55 = vpop.permute.xlu0 %54
  %vm56 = vcmask 523648
  %57 = vst.msk [vmem:[%s1] sm:$0xff] %vm56, %v55
  %s58 = scalar_lea.vmem %s0, 2
  %v59 = vld [vmem:[%s58] ss:$8 sm:$0xf]
  %s60 = scalar_lea.vmem %s0, 2
  %v61 = vld [vmem:[%s60] ss:$8 sm:$0xf0]
  %vm62 = vcmask 1047556
  %v63 = vsel %vm62, %v61, %v59
  %64 = vrot.lane.b32.xlu0 %v63, 32
  %v65 = vpop.permute.xlu0 %64
  %vm66 = vcmask 392448
  %67 = vst.msk [vmem:[%s1] sm:$0xff] %vm66, %v65
  %s68 = scalar_lea.vmem %s0, 1
  %v69 = vld [vmem:[%s68] ss:$8 sm:$0xf]
  %s70 = scalar_lea.vmem %s0, 1
  %v71 = vld [vmem:[%s70] ss:$8 sm:$0xf0]
  %vm72 = vcmask 1047556
  %v73 = vsel %vm72, %v71, %v69
  %74 = vrot.lane.b32.xlu0 %v73, 16
  %v75 = vpop.permute.xlu0 %74
  %vm76 = vcmask 261248
  %77 = vst.msk [vmem:[%s1] sm:$0xff] %vm76, %v75

// kernel: model_forward.7
$region0: #{model_forward.7}
  #allocation0 [shape = 'u32[]', space=smem, size = 0x4, offset = 0x4, fixed_abs, tag = 'smem constant byte address 0x4 - core index']
  #allocation1 [shape = 'u32[144,128]{1,0:T(1,128)}', space=vmem, size = 0x12000, scoped, tag = 'internal scratch']
  %s0 = inlined_call_operand.vmem [shape: bf16[16,128], index: 0, kind: input, shape index: {}]
  %s1 = inlined_call_operand.vmem [shape: bf16[16,128], index: 1, kind: input, shape index: {}]
  %s2 = inlined_call_operand.vmem [shape: f32[8,128], index: 2, kind: input, shape index: {}]
  %s3 = inlined_call_operand.vmem [shape: bf16[16,128], index: 3, kind: output, shape index: {}]
  %s4 = sld [smem:[#allocation0]]
  $region22: #{model_forward.7} parent=0
    _
  %s6 = ssub.s32 1, %s4
  %s7 = scalar_select 0, %s6, %s4
  // Predicated region
  $region2: #{model_forward.7} parent=0 // pred_check
    _
  $region3: #{model_forward.7} parent=0 // pred_check_branch
    %9 = sbr.rel (0) target = $region5
  $region4: #{model_forward.7} parent=0 // pred_region
    _
  $region5: #{model_forward.7} parent=0 // pred_fallthru
    _
  // Predicated region
  $region6: #{model_forward.7} parent=0 // pred_check
    _
  $region7: #{model_forward.7} parent=0 // pred_check_branch
    %11 = sbr.rel (0) target = $region9
  $region8: #{model_forward.7} parent=0 // pred_region
    _
  $region9: #{model_forward.7} parent=0 // pred_fallthru
    _
  // Predicated region
  $region10: #{model_forward.7} parent=0 // pred_check
    _
  $region11: #{model_forward.7} parent=0 // pred_check_branch
    %13 = sbr.rel (0) target = $region13
  $region12: #{model_forward.7} parent=0 // pred_region
    _
  $region13: #{model_forward.7} parent=0 // pred_fallthru
    _
  %v14 = vld [vmem:[%s0] sm:$0xf]
  %v15 = vld [vmem:[%s0 + $0x4] sm:$0xf]
  %v16 = vunpack.c.l.bf16 %v14
  %v17 = vunpack.c.l.bf16 %v15
  %v18 = vld [vmem:[%s1] sm:$0xf]
  %v19 = vld [vmem:[%s1 + $0x4] sm:$0xf]
  %v20 = vunpack.c.l.bf16 %v18
  %v21 = vunpack.c.l.bf16 %v19
  %v22 = vld [vmem:[%s2] sm:$0xff]
  %v23 = vlaneseq
  %v24 = vshrl.u32 %v23, 7
  %v25 = vsub.s32 1, %v24
  %v26 = vrot.slane %v22, %v25
  %v27 = vmul.f32 %v26, %v16
  %v28 = vmul.f32 %v26, %v17
  %v29 = vlaneseq
  %v30 = vshrl.u32 %v29, 7
  %v31 = vsub.s32 0, %v30
  %v32 = vrot.slane %v22, %v31
  %v33 = vadd.f32 %v32, %v27
  %v34 = vadd.f32 %v32, %v28
  %v35 = vlaneseq
  %v36 = vshrl.u32 %v35, 7
  %v37 = vsub.s32 2, %v36
  %v38 = vrot.slane %v22, %v37
  %v39 = vmul.f32 %v38, %v20
  %v40 = vmul.f32 %v38, %v21
  %v41 = vadd.f32 %v33, %v39
  %v42 = vadd.f32 %v34, %v40
  %v43 = vmul.f32 %v16, %v20
  %v44 = vmul.f32 %v17, %v21
  %v45 = vlaneseq
  %v46 = vshrl.u32 %v45, 7
  %v47 = vsub.s32 3, %v46
  %v48 = vrot.slane %v22, %v47
  %v49 = vmul.f32 %v48, %v43
  %v50 = vmul.f32 %v48, %v44
  %v51 = vadd.f32 %v41, %v49
  %v52 = vadd.f32 %v42, %v50
  %v53 = vpack.c.bf16 %v52, %v51
  %v55 = vunpack.c.l.b16 %v53
  %v56 = vunpack.c.h.b16 %v53
  %v57 = vpack.c.b16 %v55, %v55
  %v58 = vpack.c.b16 %v56, %v56
  %61 = vst [vmem:[%s3] sm:$0xf] %v57
  %62 = vst [vmem:[%s3 + $0x4] sm:$0xf] %v58
  // Predicated region
  $region14: #{model_forward.7} parent=0 // pred_check
    _
  $region15: #{model_forward.7} parent=0 // pred_check_branch
    %64 = sbr.rel (0) target = $region17
  $region16: #{model_forward.7} parent=0 // pred_region
    _
  $region17: #{model_forward.7} parent=0 // pred_fallthru
    _
  // Predicated region
  $region18: #{model_forward.7} parent=0 // pred_check
    _
  $region19: #{model_forward.7} parent=0 // pred_check_branch
    %66 = sbr.rel (0) target = $region21
  $region20: #{model_forward.7} parent=0 // pred_region
    _
  $region21: #{model_forward.7} parent=0 // pred_fallthru
    _

// kernel: tile.29
$region0: #{tile.29}
  %s0 = inlined_call_operand.vmem [shape: f32[8,2,64], index: 0, kind: input, shape index: {}]
  %s1 = inlined_call_operand.vmem [shape: f32[8,128], index: 1, kind: output, shape index: {}]
  $region1: #{tile.29} parent=0
    #allocation0 [shape = 'u8[32768]{0}', space=vmem, size = 0x8000, scoped, tag = 'scoped mem for input reshape']
    %s3 = sshll.u32 1, 2
    %s4 = ssub.s32 %s3, 1
    %s5 = smul.addr 2, 7
    %s6 = scalar_lea.vmem %s0, %s5
    %v7 = vld [vmem:[%s6] sm:%s4]
    %s8 = scalar_lea.vmem [#allocation0], 56
    %9 = vst [vmem:[%s8] sm:%s4] %v7
    %s10 = smul.addr 2, 6
    %s11 = scalar_lea.vmem %s0, %s10
    %v12 = vld [vmem:[%s11] sm:%s4]
    %s13 = scalar_lea.vmem [#allocation0], 48
    %14 = vst [vmem:[%s13] sm:%s4] %v12
    %s15 = smul.addr 2, 5
    %s16 = scalar_lea.vmem %s0, %s15
    %v17 = vld [vmem:[%s16] sm:%s4]
    %s18 = scalar_lea.vmem [#allocation0], 40
    %19 = vst [vmem:[%s18] sm:%s4] %v17
    %s20 = smul.addr 2, 4
    %s21 = scalar_lea.vmem %s0, %s20
    %v22 = vld [vmem:[%s21] sm:%s4]
    %s23 = scalar_lea.vmem [#allocation0], 32
    %24 = vst [vmem:[%s23] sm:%s4] %v22
    %s25 = smul.addr 2, 3
    %s26 = scalar_lea.vmem %s0, %s25
    %v27 = vld [vmem:[%s26] sm:%s4]
    %s28 = scalar_lea.vmem [#allocation0], 24
    %29 = vst [vmem:[%s28] sm:%s4] %v27
    %s30 = smul.addr 2, 2
    %s31 = scalar_lea.vmem %s0, %s30
    %v32 = vld [vmem:[%s31] sm:%s4]
    %s33 = scalar_lea.vmem [#allocation0], 16
    %34 = vst [vmem:[%s33] sm:%s4] %v32
    %s35 = scalar_lea.vmem %s0, 2
    %v36 = vld [vmem:[%s35] sm:%s4]
    %s37 = scalar_lea.vmem [#allocation0], 8
    %38 = vst [vmem:[%s37] sm:%s4] %v36
    %v39 = vld [vmem:[%s0] sm:%s4]
    %40 = vst [vmem:[#allocation0] sm:%s4] %v39
    %v41 = vld [vmem:[#allocation0] ss:$8 sm:$0xf]
    %v42 = vld [vmem:[#allocation0] ss:$8 sm:$0xf0]
    %vm43 = vcmask 1047556
    %v44 = vsel %vm43, %v42, %v41
    %vm45 = vcmask 523264
    %46 = vst.msk [vmem:[%s1] sm:$0xff] %vm45, %v44
    %s47 = scalar_lea.vmem [#allocation0], 1
    %v48 = vld [vmem:[%s47] ss:$8 sm:$0xf]
    %s49 = scalar_lea.vmem [#allocation0], 1
    %v50 = vld [vmem:[%s49] ss:$8 sm:$0xf0]
    %vm51 = vcmask 1047556
    %v52 = vsel %vm51, %v50, %v48
    %53 = vrot.lane.b32.xlu0 %v52, 64
    %v54 = vpop.permute.xlu0 %53
    %vm55 = vcmask 1048064
    %56 = vst.msk [vmem:[%s1] sm:$0xff] %vm55, %v54

// kernel: model_forward.10
$region0: #{model_forward.10}
  #allocation0 [shape = 'u32[]', space=smem, size = 0x4, offset = 0x4, fixed_abs, tag = 'smem constant byte address 0x4 - core index']
  #allocation1 [shape = 'u32[144,128]{1,0:T(1,128)}', space=vmem, size = 0x12000, scoped, tag = 'internal scratch']
  %s0 = inlined_call_operand.vmem [shape: bf16[8,128], index: 0, kind: input, shape index: {}]
  %s1 = inlined_call_operand.vmem [shape: bf16[8,128], index: 1, kind: input, shape index: {}]
  %s2 = inlined_call_operand.vmem [shape: f32[8,128], index: 2, kind: input, shape index: {}]
  %s3 = inlined_call_operand.vmem [shape: bf16[8,128], index: 3, kind: output, shape index: {}]
  %s4 = sld [smem:[#allocation0]]
  $region22: #{model_forward.10} parent=0
    _
  %s6 = ssub.s32 1, %s4
  %s7 = scalar_select 0, %s6, %s4
  // Predicated region
  $region2: #{model_forward.10} parent=0 // pred_check
    _
  $region3: #{model_forward.10} parent=0 // pred_check_branch
    %9 = sbr.rel (0) target = $region5
  $region4: #{model_forward.10} parent=0 // pred_region
    _
  $region5: #{model_forward.10} parent=0 // pred_fallthru
    _
  // Predicated region
  $region6: #{model_forward.10} parent=0 // pred_check
    _
  $region7: #{model_forward.10} parent=0 // pred_check_branch
    %11 = sbr.rel (0) target = $region9
  $region8: #{model_forward.10} parent=0 // pred_region
    _
  $region9: #{model_forward.10} parent=0 // pred_fallthru
    _
  // Predicated region
  $region10: #{model_forward.10} parent=0 // pred_check
    _
  $region11: #{model_forward.10} parent=0 // pred_check_branch
    %13 = sbr.rel (0) target = $region13
  $region12: #{model_forward.10} parent=0 // pred_region
    _
  $region13: #{model_forward.10} parent=0 // pred_fallthru
    _
  %v14 = vld [vmem:[%s0] sm:$0xf]
  %v15 = vunpack.c.l.bf16 %v14
  %v16 = vld [vmem:[%s1] sm:$0xf]
  %v17 = vunpack.c.l.bf16 %v16
  %v18 = vld [vmem:[%s2] sm:$0xff]
  %v19 = vlaneseq
  %v20 = vshrl.u32 %v19, 7
  %v21 = vsub.s32 1, %v20
  %v22 = vrot.slane %v18, %v21
  %v23 = vmul.f32 %v22, %v15
  %v24 = vlaneseq
  %v25 = vshrl.u32 %v24, 7
  %v26 = vsub.s32 0, %v25
  %v27 = vrot.slane %v18, %v26
  %v28 = vadd.f32 %v27, %v23
  %v29 = vlaneseq
  %v30 = vshrl.u32 %v29, 7
  %v31 = vsub.s32 2, %v30
  %v32 = vrot.slane %v18, %v31
  %v33 = vmul.f32 %v32, %v17
  %v34 = vadd.f32 %v28, %v33
  %v35 = vmul.f32 %v15, %v17
  %v36 = vlaneseq
  %v37 = vshrl.u32 %v36, 7
  %v38 = vsub.s32 3, %v37
  %v39 = vrot.slane %v18, %v38
  %v40 = vmul.f32 %v39, %v35
  %v41 = vadd.f32 %v34, %v40
  %v42 = vpack.c.bf16 %v41, %v41
  %43 = vst [vmem:[%s3] sm:$0xf] %v42
  // Predicated region
  $region14: #{model_forward.10} parent=0 // pred_check
    _
  $region15: #{model_forward.10} parent=0 // pred_check_branch
    %45 = sbr.rel (0) target = $region17
  $region16: #{model_forward.10} parent=0 // pred_region
    _
  $region17: #{model_forward.10} parent=0 // pred_fallthru
    _
  // Predicated region
  $region18: #{model_forward.10} parent=0 // pred_check
    _
  $region19: #{model_forward.10} parent=0 // pred_check_branch
    %47 = sbr.rel (0) target = $region21
  $region20: #{model_forward.10} parent=0 // pred_region
    _
  $region21: #{model_forward.10} parent=0 // pred_fallthru
    _

// kernel: model_forward.11
$region0: #{model_forward.11}
  #allocation0 [shape = 'u32[]', space=smem, size = 0x4, offset = 0x4, fixed_abs, tag = 'smem constant byte address 0x4 - core index']
  #allocation1 [shape = 'u32[144,128]{1,0:T(1,128)}', space=vmem, size = 0x12000, scoped, tag = 'internal scratch']
  %s0 = inlined_call_operand.vmem [shape: bf16[8,1280], index: 0, kind: input, shape index: {}]
  %s1 = inlined_call_operand.vmem [shape: bf16[8,1280], index: 1, kind: input, shape index: {}]
  %s2 = inlined_call_operand.vmem [shape: f32[8,1280], index: 2, kind: input, shape index: {}]
  %s3 = inlined_call_operand.vmem [shape: bf16[8,1280], index: 3, kind: output, shape index: {}]
  %s4 = sld [smem:[#allocation0]]
  $region45: #{model_forward.11} parent=0
    _
  %s6 = ssub.s32 1, %s4
  %s7 = scalar_select 0, %s6, %s4
  loop: start=0, step=1, limit=4
  $region2: #{model_forward.11} parent=0 // loop_pre_header
    _
  $region3: #{model_forward.11} parent=0 // loop_header
    %s9 = sphi 0, %s13
    %p10 = scmp.ge.s32.totalorder %s9, 4
    %s16 = sphi 0, %s28
    %s17 = sphi 0, %s24
    %s18 = sphi 0, %s16
    %s19 = sphi 0, %s17
    %s20 = sphi 0, %s18
    %s21 = sphi 0, %s19
    %s33 = sphi 0, %s35
    %s36 = sphi 0, %s33
    %s37 = sphi 0, %s36
    %s53 = sphi 0, %s37
    %s61 = sphi 0, %s63
    %s64 = sphi 0, %s61
    %s65 = sphi 0, %s64
    %s81 = sphi 0, %s65
    %s87 = sphi 0, %s89
    %s90 = sphi 0, %s87
    %s91 = sphi 0, %s90
    %s107 = sphi 0, %s91
    %s115 = sphi 0, %s117
    %s118 = sphi 0, %s115
    %s119 = sphi 0, %s118
    %s135 = sphi 0, %s119
  $region4: #{model_forward.11} parent=0 // loop_header_branch
    %12 = sbr.rel (%p10) target = $region8
  $region5: #{model_forward.11} parent=0 // loop_body
    %s14 = ssub.s32 %s9, 1
    %s15 = ssub.s32 %s9, 2
    %s22 = sadd.s32 1, %s17
    %p23 = scmp.ge.s32.totalorder %s22, 2
    %s24 = scalar_select %p23, 0, %s22
    %s25 = sadd.s32 1, %s16
    %s26 = scalar_select %p23, %s25, %s16
    %p27 = scmp.ge.s32.totalorder %s26, 1
    %s28 = scalar_select %p27, 0, %s26
    %s29 = ssub.s32 %s16, %s28
    %s30 = ssub.s32 %s17, %s24
    %s31 = sor.u32 %s29, %s30
    %p32 = scmp.eq.s32.totalorder %s31, 0
    %s34 = sadd.s32 %s33, 1
    %s35 = scalar_select %p32, %s33, %s34
    %p38 = pneg %p32
    %p39 = scmp.eq.s32.totalorder %s9, 1
    %p40 = por %p38, %p39
    %p41 = scmp.ne.s32.totalorder %s33, %s36
    %p42 = scmp.eq.s32.totalorder %s9, 0
    %p43 = por %p41, %p42
    %p44 = scmp.ne.s32.totalorder %s33, %s36
    %p45 = scmp.eq.s32.totalorder %s14, 1
    %p46 = por %p44, %p45
    %p47 = scmp.ne.s32.totalorder %s36, %s37
    %p48 = scmp.eq.s32.totalorder %s14, 0
    %p49 = por %p47, %p48
    %p50 = scmp.ne.s32.totalorder %s36, %s37
    %p51 = scmp.eq.s32.totalorder %s15, 1
    %p52 = por %p50, %p51
    %p54 = scmp.ne.s32.totalorder %s37, %s53
    %p55 = scmp.eq.s32.totalorder %s15, 0
    %p56 = por %p54, %p55
    %s57 = ssub.s32 %s16, %s28
    %s58 = ssub.s32 %s17, %s24
    %s59 = sor.u32 %s57, %s58
    %p60 = scmp.eq.s32.totalorder %s59, 0
    %s62 = sadd.s32 %s61, 1
    %s63 = scalar_select %p60, %s61, %s62
    %p66 = pneg %p60
    %p67 = scmp.eq.s32.totalorder %s9, 1
    %p68 = por %p66, %p67
    %p69 = scmp.ne.s32.totalorder %s61, %s64
    %p70 = scmp.eq.s32.totalorder %s9, 0
    %p71 = por %p69, %p70
    %p72 = scmp.ne.s32.totalorder %s61, %s64
    %p73 = scmp.eq.s32.totalorder %s14, 1
    %p74 = por %p72, %p73
    %p75 = scmp.ne.s32.totalorder %s64, %s65
    %p76 = scmp.eq.s32.totalorder %s14, 0
    %p77 = por %p75, %p76
    %p78 = scmp.ne.s32.totalorder %s64, %s65
    %p79 = scmp.eq.s32.totalorder %s15, 1
    %p80 = por %p78, %p79
    %p82 = scmp.ne.s32.totalorder %s65, %s81
    %p83 = scmp.eq.s32.totalorder %s15, 0
    %p84 = por %p82, %p83
    %s85 = ssub.s32 %s17, %s24
    %p86 = scmp.eq.s32.totalorder %s85, 0
    %s88 = sadd.s32 %s87, 1
    %s89 = scalar_select %p86, %s87, %s88
    %p92 = pneg %p86
    %p93 = scmp.eq.s32.totalorder %s9, 1
    %p94 = por %p92, %p93
    %p95 = scmp.ne.s32.totalorder %s87, %s90
    %p96 = scmp.eq.s32.totalorder %s9, 0
    %p97 = por %p95, %p96
    %p98 = scmp.ne.s32.totalorder %s87, %s90
    %p99 = scmp.eq.s32.totalorder %s14, 1
    %p100 = por %p98, %p99
    %p101 = scmp.ne.s32.totalorder %s90, %s91
    %p102 = scmp.eq.s32.totalorder %s14, 0
    %p103 = por %p101, %p102
    %p104 = scmp.ne.s32.totalorder %s90, %s91
    %p105 = scmp.eq.s32.totalorder %s15, 1
    %p106 = por %p104, %p105
    %p108 = scmp.ne.s32.totalorder %s91, %s107
    %p109 = scmp.eq.s32.totalorder %s15, 0
    %p110 = por %p108, %p109
    %s111 = ssub.s32 %s16, %s28
    %s112 = ssub.s32 %s17, %s24
    %s113 = sor.u32 %s111, %s112
    %p114 = scmp.eq.s32.totalorder %s113, 0
    %s116 = sadd.s32 %s115, 1
    %s117 = scalar_select %p114, %s115, %s116
    %p120 = pneg %p114
    %p121 = scmp.eq.s32.totalorder %s9, 1
    %p122 = por %p120, %p121
    %p123 = scmp.ne.s32.totalorder %s115, %s118
    %p124 = scmp.eq.s32.totalorder %s9, 0
    %p125 = por %p123, %p124
    %p126 = scmp.ne.s32.totalorder %s115, %s118
    %p127 = scmp.eq.s32.totalorder %s14, 1
    %p128 = por %p126, %p127
    %p129 = scmp.ne.s32.totalorder %s118, %s119
    %p130 = scmp.eq.s32.totalorder %s14, 0
    %p131 = por %p129, %p130
    %p132 = scmp.ne.s32.totalorder %s118, %s119
    %p133 = scmp.eq.s32.totalorder %s15, 1
    %p134 = por %p132, %p133
    %p136 = scmp.ne.s32.totalorder %s119, %s135
    %p137 = scmp.eq.s32.totalorder %s15, 0
    %p138 = por %p136, %p137
    %p139 = scmp.le.s32.totalorder 1, %s9
    %p140 = scmp.lt.s32.totalorder %s9, 3
    %p141 = pnand %p139, %p140
    %p142 = pneg %p141
    // Predicated region
    $region9: #{model_forward.11} parent=5 // pred_check
      _
    $region10: #{model_forward.11} parent=5 // pred_check_branch
      %144 = sbr.rel (%p141) target = $region12
    $region11: #{model_forward.11} parent=5 // pred_region
      %s145 = ssub.s32 %s9, 1
    $region12: #{model_forward.11} parent=5 // pred_fallthru
      _
    %p146 = scmp.lt.s32.totalorder %s9, 2
    // Predicated region
    $region13: #{model_forward.11} parent=5 // pred_check
      %p147 = pneg %p146
    $region14: #{model_forward.11} parent=5 // pred_check_branch
      %149 = sbr.rel (%p147) target = $region16
    $region15: #{model_forward.11} parent=5 // pred_region
      // Predicated region
      $region17: #{model_forward.11} parent=15 // pred_check
        %p150 = pneg %p43
      $region18: #{model_forward.11} parent=15 // pred_check_branch
        %152 = sbr.rel (%p150) target = $region20
      $region19: #{model_forward.11} parent=15 // pred_region
        %s153 = smul.u32 5, %s17
        %p154 = scmp.lt.s32.totalorder %s16, 0
        %s155 = scalar_select %p154, %s16, 0
        %p156 = scmp.lt.s32.totalorder %s153, 9
        %s157 = scalar_select %p156, %s153, 9
        %s158 = smul.addr %s155, 10
        %s159 = sadd.s32 %s157, %s158
        %s160 = smul.addr %s159, 4
        %s161 = scalar_lea.vmem %s0, %s160
        %s162 = smul.u32 5, %s17
      $region20: #{model_forward.11} parent=15 // pred_fallthru
        _
      // Predicated region
      $region21: #{model_forward.11} parent=15 // pred_check
        %p163 = pneg %p71
      $region22: #{model_forward.11} parent=15 // pred_check_branch
        %165 = sbr.rel (%p163) target = $region24
      $region23: #{model_forward.11} parent=15 // pred_region
        %s166 = smul.u32 5, %s17
        %p167 = scmp.lt.s32.totalorder %s16, 0
        %s168 = scalar_select %p167, %s16, 0
        %p169 = scmp.lt.s32.totalorder %s166, 9
        %s170 = scalar_select %p169, %s166, 9
        %s171 = smul.addr %s168, 10
        %s172 = sadd.s32 %s170, %s171
        %s173 = smul.addr %s172, 4
        %s174 = scalar_lea.vmem %s1, %s173
        %s175 = smul.u32 5, %s17
      $region24: #{model_forward.11} parent=15 // pred_fallthru
        _
      // Predicated region
      $region25: #{model_forward.11} parent=15 // pred_check
        %p176 = pneg %p97
      $region26: #{model_forward.11} parent=15 // pred_check_branch
        %178 = sbr.rel (%p176) target = $region28
      $region27: #{model_forward.11} parent=15 // pred_region
        %s179 = smul.u32 5, %s17
        %p180 = scmp.lt.s32.totalorder %s179, 9
        %s181 = scalar_select %p180, %s179, 9
        %s182 = smul.addr %s181, 8
        %s183 = scalar_lea.vmem %s2, %s182
        %s184 = smul.u32 5, %s17
      $region28: #{model_forward.11} parent=15 // pred_fallthru
        _
    $region16: #{model_forward.11} parent=5 // pred_fallthru
      _
    %p185 = scmp.le.s32.totalorder 1, %s9
    %p186 = scmp.lt.s32.totalorder %s9, 3
    %p187 = pnand %p185, %p186
    %p188 = pneg %p187
    // Predicated region
    $region29: #{model_forward.11} parent=5 // pred_check
      _
    $region30: #{model_forward.11} parent=5 // pred_check_branch
      %190 = sbr.rel (%p187) target = $region32
    $region31: #{model_forward.11} parent=5 // pred_region
      %s191 = ssub.s32 %s9, 1
      %s192 = smul.u32 5, %s19
      %p193 = scmp.lt.s32.totalorder %s18, 0
      %s194 = scalar_select %p193, %s18, 0
      %p195 = scmp.lt.s32.totalorder %s192, 9
      %s196 = scalar_select %p195, %s192, 9
      %s197 = smul.addr %s194, 10
      %s198 = sadd.s32 %s196, %s197
      %s199 = smul.addr %s198, 4
      %s200 = scalar_lea.vmem %s0, %s199
      %p201 = pneg %p49
      %p202 = pneg %p46
      %s203 = smul.u32 5, %s19
      %p204 = scmp.lt.s32.totalorder %s18, 0
      %s205 = scalar_select %p204, %s18, 0
      %p206 = scmp.lt.s32.totalorder %s203, 9
      %s207 = scalar_select %p206, %s203, 9
      %s208 = smul.addr %s205, 10
      %s209 = sadd.s32 %s207, %s208
      %s210 = smul.addr %s209, 4
      %s211 = scalar_lea.vmem %s1, %s210
      %p212 = pneg %p77
      %p213 = pneg %p74
      %s214 = smul.u32 5, %s19
      %p215 = scmp.lt.s32.totalorder %s214, 9
      %s216 = scalar_select %p215, %s214, 9
      %s217 = smul.addr %s216, 8
      %s218 = scalar_lea.vmem %s2, %s217
      %p219 = pneg %p103
      %p220 = pneg %p100
      %p221 = pneg %p131
      %p222 = pneg %p128
      %s223 = smul.u32 5, %s19
      %p224 = scmp.lt.s32.totalorder %s18, 0
      %s225 = scalar_select %p224, %s18, 0
      %p226 = scmp.lt.s32.totalorder %s223, 9
      %s227 = scalar_select %p226, %s223, 9
      %s228 = smul.addr %s225, 10
      %s229 = sadd.s32 %s227, %s228
      %s230 = smul.addr %s229, 4
      %s231 = scalar_lea.vmem %s3, %s230
      %s232 = smul.u32 5, %s19
      %p233 = scmp.lt.s32.totalorder %s18, 0
      %s234 = scalar_select %p233, %s18, 0
      %p235 = scmp.lt.s32.totalorder %s232, 9
      %s236 = scalar_select %p235, %s232, 9
      %s237 = smul.addr %s234, 10
      %s238 = sadd.s32 %s236, %s237
      %s239 = smul.addr %s238, 4
      %s240 = scalar_lea.vmem %s0, %s239
      %s241 = smul.u32 5, %s19
      %s242 = smul.u32 5, %s19
      %p243 = scmp.lt.s32.totalorder %s18, 0
      %s244 = scalar_select %p243, %s18, 0
      %p245 = scmp.lt.s32.totalorder %s242, 9
      %s246 = scalar_select %p245, %s242, 9
      %s247 = smul.addr %s244, 10
      %s248 = sadd.s32 %s246, %s247
      %s249 = smul.addr %s248, 4
      %s250 = scalar_lea.vmem %s1, %s249
      %s251 = smul.u32 5, %s19
      %s252 = smul.u32 5, %s19
      %p253 = scmp.lt.s32.totalorder %s252, 9
      %s254 = scalar_select %p253, %s252, 9
      %s255 = smul.addr %s254, 8
      %s256 = scalar_lea.vmem %s2, %s255
      %s257 = smul.u32 5, %s19
      %s258 = smul.u32 5, %s19
      %p259 = scmp.lt.s32.totalorder %s18, 0
      %s260 = scalar_select %p259, %s18, 0
      %p261 = scmp.lt.s32.totalorder %s258, 9
      %s262 = scalar_select %p261, %s258, 9
      %s263 = smul.addr %s260, 10
      %s264 = sadd.s32 %s262, %s263
      %s265 = smul.addr %s264, 4
      %s266 = scalar_lea.vmem %s3, %s265
      %s267 = smul.u32 5, %s19
      %v268 = vld [vmem:[%s240] sm:$0xff]
      %v269 = vld [vmem:[%s240 + $0x8] sm:$0xff]
      %v270 = vld [vmem:[%s240 + $0x10] sm:$0xf]
      %v271 = vunpack.c.l.bf16 %v268
      %v272 = vunpack.c.h.bf16 %v268
      %v273 = vunpack.c.l.bf16 %v269
      %v274 = vunpack.c.h.bf16 %v269
      %v275 = vunpack.c.l.bf16 %v270
      %v276 = vld [vmem:[%s250] sm:$0xff]
      %v277 = vld [vmem:[%s250 + $0x8] sm:$0xff]
      %v278 = vld [vmem:[%s250 + $0x10] sm:$0xf]
      %v279 = vunpack.c.l.bf16 %v276
      %v280 = vunpack.c.h.bf16 %v276
      %v281 = vunpack.c.l.bf16 %v277
      %v282 = vunpack.c.h.bf16 %v277
      %v283 = vunpack.c.l.bf16 %v278
      %v284 = vld [vmem:[%s256] sm:$0xff]
      %v285 = vld [vmem:[%s256 + $0x8] sm:$0xff]
      %v286 = vld [vmem:[%s256 + $0x10] sm:$0xff]
      %v287 = vld [vmem:[%s256 + $0x18] sm:$0xff]
      %v288 = vld [vmem:[%s256 + $0x20] sm:$0xff]
      %v289 = vlaneseq
      %v290 = vshrl.u32 %v289, 7
      %v291 = vsub.s32 1, %v290
      %v292 = vrot.slane %v284, %v291
      %v293 = vlaneseq
      %v294 = vshrl.u32 %v293, 7
      %v295 = vsub.s32 1, %v294
      %v296 = vrot.slane %v285, %v295
      %v297 = vlaneseq
      %v298 = vshrl.u32 %v297, 7
      %v299 = vsub.s32 1, %v298
      %v300 = vrot.slane %v286, %v299
      %v301 = vlaneseq
      %v302 = vshrl.u32 %v301, 7
      %v303 = vsub.s32 1, %v302
      %v304 = vrot.slane %v287, %v303
      %v305 = vlaneseq
      %v306 = vshrl.u32 %v305, 7
      %v307 = vsub.s32 1, %v306
      %v308 = vrot.slane %v288, %v307
      %v309 = vmul.f32 %v292, %v271
      %v310 = vmul.f32 %v296, %v272
      %v311 = vmul.f32 %v300, %v273
      %v312 = vmul.f32 %v304, %v274
      %v313 = vmul.f32 %v308, %v275
      %v314 = vlaneseq
      %v315 = vshrl.u32 %v314, 7
      %v316 = vsub.s32 0, %v315
      %v317 = vrot.slane %v284, %v316
      %v318 = vlaneseq
      %v319 = vshrl.u32 %v318, 7
      %v320 = vsub.s32 0, %v319
      %v321 = vrot.slane %v285, %v320
      %v322 = vlaneseq
      %v323 = vshrl.u32 %v322, 7
      %v324 = vsub.s32 0, %v323
      %v325 = vrot.slane %v286, %v324
      %v326 = vlaneseq
      %v327 = vshrl.u32 %v326, 7
      %v328 = vsub.s32 0, %v327
      %v329 = vrot.slane %v287, %v328
      %v330 = vlaneseq
      %v331 = vshrl.u32 %v330, 7
      %v332 = vsub.s32 0, %v331
      %v333 = vrot.slane %v288, %v332
      %v334 = vadd.f32 %v317, %v309
      %v335 = vadd.f32 %v321, %v310
      %v336 = vadd.f32 %v325, %v311
      %v337 = vadd.f32 %v329, %v312
      %v338 = vadd.f32 %v333, %v313
      %v339 = vlaneseq
      %v340 = vshrl.u32 %v339, 7
      %v341 = vsub.s32 2, %v340
      %v342 = vrot.slane %v284, %v341
      %v343 = vlaneseq
      %v344 = vshrl.u32 %v343, 7
      %v345 = vsub.s32 2, %v344
      %v346 = vrot.slane %v285, %v345
      %v347 = vlaneseq
      %v348 = vshrl.u32 %v347, 7
      %v349 = vsub.s32 2, %v348
      %v350 = vrot.slane %v286, %v349
      %v351 = vlaneseq
      %v352 = vshrl.u32 %v351, 7
      %v353 = vsub.s32 2, %v352
      %v354 = vrot.slane %v287, %v353
      %v355 = vlaneseq
      %v356 = vshrl.u32 %v355, 7
      %v357 = vsub.s32 2, %v356
      %v358 = vrot.slane %v288, %v357
      %v359 = vmul.f32 %v342, %v279
      %v360 = vmul.f32 %v346, %v280
      %v361 = vmul.f32 %v350, %v281
      %v362 = vmul.f32 %v354, %v282
      %v363 = vmul.f32 %v358, %v283
      %v364 = vadd.f32 %v334, %v359
      %v365 = vadd.f32 %v335, %v360
      %v366 = vadd.f32 %v336, %v361
      %v367 = vadd.f32 %v337, %v362
      %v368 = vadd.f32 %v338, %v363
      %v369 = vmul.f32 %v271, %v279
      %v370 = vmul.f32 %v272, %v280
      %v371 = vmul.f32 %v273, %v281
      %v372 = vmul.f32 %v274, %v282
      %v373 = vmul.f32 %v275, %v283
      %v374 = vlaneseq
      %v375 = vshrl.u32 %v374, 7
      %v376 = vsub.s32 3, %v375
      %v377 = vrot.slane %v284, %v376
      %v378 = vlaneseq
      %v379 = vshrl.u32 %v378, 7
      %v380 = vsub.s32 3, %v379
      %v381 = vrot.slane %v285, %v380
      %v382 = vlaneseq
      %v383 = vshrl.u32 %v382, 7
      %v384 = vsub.s32 3, %v383
      %v385 = vrot.slane %v286, %v384
      %v386 = vlaneseq
      %v387 = vshrl.u32 %v386, 7
      %v388 = vsub.s32 3, %v387
      %v389 = vrot.slane %v287, %v388
      %v390 = vlaneseq
      %v391 = vshrl.u32 %v390, 7
      %v392 = vsub.s32 3, %v391
      %v393 = vrot.slane %v288, %v392
      %v394 = vmul.f32 %v377, %v369
      %v395 = vmul.f32 %v381, %v370
      %v396 = vmul.f32 %v385, %v371
      %v397 = vmul.f32 %v389, %v372
      %v398 = vmul.f32 %v393, %v373
      %v399 = vadd.f32 %v364, %v394
      %v400 = vadd.f32 %v365, %v395
      %v401 = vadd.f32 %v366, %v396
      %v402 = vadd.f32 %v367, %v397
      %v403 = vadd.f32 %v368, %v398
      %v404 = vpack.c.bf16 %v399, %v399
      %v405 = vpack.c.bf16 %v400, %v400
      %v406 = vpack.c.bf16 %v401, %v401
      %v407 = vpack.c.bf16 %v402, %v402
      %v408 = vpack.c.bf16 %v403, %v403
      %v414 = vunpack.c.l.b16 %v404
      %v415 = vunpack.c.l.b16 %v405
      %v416 = vunpack.c.l.b16 %v406
      %v417 = vunpack.c.l.b16 %v407
      %v418 = vunpack.c.l.b16 %v408
      %v419 = vpack.c.b16 %v415, %v414
      %v420 = vpack.c.b16 %v417, %v416
      %v421 = vpack.c.b16 %v418, %v418
      %425 = vst [vmem:[%s266] sm:$0xff] %v419
      %426 = vst [vmem:[%s266 + $0x8] sm:$0xff] %v420
      %427 = vst [vmem:[%s266 + $0x10] sm:$0xf] %v421
      %s428 = smul.u32 5, %s19
      %p429 = scmp.lt.s32.totalorder %s18, 0
      %s430 = scalar_select %p429, %s18, 0
      %p431 = scmp.lt.s32.totalorder %s428, 9
      %s432 = scalar_select %p431, %s428, 9
      %s433 = smul.addr %s430, 10
      %s434 = sadd.s32 %s432, %s433
      %s435 = smul.addr %s434, 4
      %s436 = scalar_lea.vmem %s3, %s435
      // Predicated region
      $region33: #{model_forward.11} parent=31 // pred_check
        %p437 = pneg %p128
      $region34: #{model_forward.11} parent=31 // pred_check_branch
        %439 = sbr.rel (%p437) target = $region36
      $region35: #{model_forward.11} parent=31 // pred_region
        %s440 = smul.u32 5, %s19
      $region36: #{model_forward.11} parent=31 // pred_fallthru
        _
    $region32: #{model_forward.11} parent=5 // pred_fallthru
      _
    %p441 = scmp.le.s32.totalorder 2, %s9
    // Predicated region
    $region37: #{model_forward.11} parent=5 // pred_check
      %p442 = pneg %p441
    $region38: #{model_forward.11} parent=5 // pred_check_branch
      %444 = sbr.rel (%p442) target = $region40
    $region39: #{model_forward.11} parent=5 // pred_region
      %s445 = ssub.s32 %s9, 2
      // Predicated region
      $region41: #{model_forward.11} parent=39 // pred_check
        %p446 = pneg %p134
      $region42: #{model_forward.11} parent=39 // pred_check_branch
        %448 = sbr.rel (%p446) target = $region44
      $region43: #{model_forward.11} parent=39 // pred_region
        %s449 = smul.u32 5, %s21
        %p450 = scmp.lt.s32.totalorder %s20, 0
        %s451 = scalar_select %p450, %s20, 0
        %p452 = scmp.lt.s32.totalorder %s449, 9
        %s453 = scalar_select %p452, %s449, 9
        %s454 = smul.addr %s451, 10
        %s455 = sadd.s32 %s453, %s454
        %s456 = smul.addr %s455, 4
        %s457 = scalar_lea.vmem %s3, %s456
      $region44: #{model_forward.11} parent=39 // pred_fallthru
        _
    $region40: #{model_forward.11} parent=5 // pred_fallthru
      _
  $region6: #{model_forward.11} parent=0 // loop_footer
    %s13 = sadd.s32 1, %s9
  $region7: #{model_forward.11} parent=0 // loop_footer_branch
    %8 = sbr.rel target = $region3
  $region8: #{model_forward.11} parent=0 // loop_exit
    _

// kernel: model_forward.12
$region0: #{model_forward.12}
  #allocation0 [shape = 'u32[]', space=smem, size = 0x4, offset = 0x4, fixed_abs, tag = 'smem constant byte address 0x4 - core index']
  #allocation1 [shape = 'u32[144,128]{1,0:T(1,128)}', space=vmem, size = 0x12000, scoped, tag = 'internal scratch']
  %s0 = inlined_call_operand.vmem [shape: bf16[8,640], index: 0, kind: input, shape index: {}]
  %s1 = inlined_call_operand.vmem [shape: bf16[8,640], index: 1, kind: input, shape index: {}]
  %s2 = inlined_call_operand.vmem [shape: f32[8,640], index: 2, kind: input, shape index: {}]
  %s3 = inlined_call_operand.vmem [shape: bf16[8,640], index: 3, kind: output, shape index: {}]
  %s4 = sld [smem:[#allocation0]]
  $region45: #{model_forward.12} parent=0
    _
  %s6 = ssub.s32 1, %s4
  %s7 = scalar_select 0, %s6, %s4
  loop: start=0, step=1, limit=7
  $region2: #{model_forward.12} parent=0 // loop_pre_header
    _
  $region3: #{model_forward.12} parent=0 // loop_header
    %s9 = sphi 0, %s13
    %p10 = scmp.ge.s32.totalorder %s9, 7
    %s16 = sphi 0, %s28
    %s17 = sphi 0, %s24
    %s18 = sphi 0, %s16
    %s19 = sphi 0, %s17
    %s20 = sphi 0, %s18
    %s21 = sphi 0, %s19
    %s33 = sphi 0, %s35
    %s36 = sphi 0, %s33
    %s37 = sphi 0, %s36
    %s53 = sphi 0, %s37
    %s61 = sphi 0, %s63
    %s64 = sphi 0, %s61
    %s65 = sphi 0, %s64
    %s81 = sphi 0, %s65
    %s87 = sphi 0, %s89
    %s90 = sphi 0, %s87
    %s91 = sphi 0, %s90
    %s107 = sphi 0, %s91
    %s115 = sphi 0, %s117
    %s118 = sphi 0, %s115
    %s119 = sphi 0, %s118
    %s135 = sphi 0, %s119
  $region4: #{model_forward.12} parent=0 // loop_header_branch
    %12 = sbr.rel (%p10) target = $region8
  $region5: #{model_forward.12} parent=0 // loop_body
    %s14 = ssub.s32 %s9, 1
    %s15 = ssub.s32 %s9, 2
    %s22 = sadd.s32 1, %s17
    %p23 = scmp.ge.s32.totalorder %s22, 5
    %s24 = scalar_select %p23, 0, %s22
    %s25 = sadd.s32 1, %s16
    %s26 = scalar_select %p23, %s25, %s16
    %p27 = scmp.ge.s32.totalorder %s26, 1
    %s28 = scalar_select %p27, 0, %s26
    %s29 = ssub.s32 %s16, %s28
    %s30 = ssub.s32 %s17, %s24
    %s31 = sor.u32 %s29, %s30
    %p32 = scmp.eq.s32.totalorder %s31, 0
    %s34 = sadd.s32 %s33, 1
    %s35 = scalar_select %p32, %s33, %s34
    %p38 = pneg %p32
    %p39 = scmp.eq.s32.totalorder %s9, 4
    %p40 = por %p38, %p39
    %p41 = scmp.ne.s32.totalorder %s33, %s36
    %p42 = scmp.eq.s32.totalorder %s9, 0
    %p43 = por %p41, %p42
    %p44 = scmp.ne.s32.totalorder %s33, %s36
    %p45 = scmp.eq.s32.totalorder %s14, 4
    %p46 = por %p44, %p45
    %p47 = scmp.ne.s32.totalorder %s36, %s37
    %p48 = scmp.eq.s32.totalorder %s14, 0
    %p49 = por %p47, %p48
    %p50 = scmp.ne.s32.totalorder %s36, %s37
    %p51 = scmp.eq.s32.totalorder %s15, 4
    %p52 = por %p50, %p51
    %p54 = scmp.ne.s32.totalorder %s37, %s53
    %p55 = scmp.eq.s32.totalorder %s15, 0
    %p56 = por %p54, %p55
    %s57 = ssub.s32 %s16, %s28
    %s58 = ssub.s32 %s17, %s24
    %s59 = sor.u32 %s57, %s58
    %p60 = scmp.eq.s32.totalorder %s59, 0
    %s62 = sadd.s32 %s61, 1
    %s63 = scalar_select %p60, %s61, %s62
    %p66 = pneg %p60
    %p67 = scmp.eq.s32.totalorder %s9, 4
    %p68 = por %p66, %p67
    %p69 = scmp.ne.s32.totalorder %s61, %s64
    %p70 = scmp.eq.s32.totalorder %s9, 0
    %p71 = por %p69, %p70
    %p72 = scmp.ne.s32.totalorder %s61, %s64
    %p73 = scmp.eq.s32.totalorder %s14, 4
    %p74 = por %p72, %p73
    %p75 = scmp.ne.s32.totalorder %s64, %s65
    %p76 = scmp.eq.s32.totalorder %s14, 0
    %p77 = por %p75, %p76
    %p78 = scmp.ne.s32.totalorder %s64, %s65
    %p79 = scmp.eq.s32.totalorder %s15, 4
    %p80 = por %p78, %p79
    %p82 = scmp.ne.s32.totalorder %s65, %s81
    %p83 = scmp.eq.s32.totalorder %s15, 0
    %p84 = por %p82, %p83
    %s85 = ssub.s32 %s17, %s24
    %p86 = scmp.eq.s32.totalorder %s85, 0
    %s88 = sadd.s32 %s87, 1
    %s89 = scalar_select %p86, %s87, %s88
    %p92 = pneg %p86
    %p93 = scmp.eq.s32.totalorder %s9, 4
    %p94 = por %p92, %p93
    %p95 = scmp.ne.s32.totalorder %s87, %s90
    %p96 = scmp.eq.s32.totalorder %s9, 0
    %p97 = por %p95, %p96
    %p98 = scmp.ne.s32.totalorder %s87, %s90
    %p99 = scmp.eq.s32.totalorder %s14, 4
    %p100 = por %p98, %p99
    %p101 = scmp.ne.s32.totalorder %s90, %s91
    %p102 = scmp.eq.s32.totalorder %s14, 0
    %p103 = por %p101, %p102
    %p104 = scmp.ne.s32.totalorder %s90, %s91
    %p105 = scmp.eq.s32.totalorder %s15, 4
    %p106 = por %p104, %p105
    %p108 = scmp.ne.s32.totalorder %s91, %s107
    %p109 = scmp.eq.s32.totalorder %s15, 0
    %p110 = por %p108, %p109
    %s111 = ssub.s32 %s16, %s28
    %s112 = ssub.s32 %s17, %s24
    %s113 = sor.u32 %s111, %s112
    %p114 = scmp.eq.s32.totalorder %s113, 0
    %s116 = sadd.s32 %s115, 1
    %s117 = scalar_select %p114, %s115, %s116
    %p120 = pneg %p114
    %p121 = scmp.eq.s32.totalorder %s9, 4
    %p122 = por %p120, %p121
    %p123 = scmp.ne.s32.totalorder %s115, %s118
    %p124 = scmp.eq.s32.totalorder %s9, 0
    %p125 = por %p123, %p124
    %p126 = scmp.ne.s32.totalorder %s115, %s118
    %p127 = scmp.eq.s32.totalorder %s14, 4
    %p128 = por %p126, %p127
    %p129 = scmp.ne.s32.totalorder %s118, %s119
    %p130 = scmp.eq.s32.totalorder %s14, 0
    %p131 = por %p129, %p130
    %p132 = scmp.ne.s32.totalorder %s118, %s119
    %p133 = scmp.eq.s32.totalorder %s15, 4
    %p134 = por %p132, %p133
    %p136 = scmp.ne.s32.totalorder %s119, %s135
    %p137 = scmp.eq.s32.totalorder %s15, 0
    %p138 = por %p136, %p137
    %p139 = scmp.le.s32.totalorder 1, %s9
    %p140 = scmp.lt.s32.totalorder %s9, 6
    %p141 = pnand %p139, %p140
    %p142 = pneg %p141
    // Predicated region
    $region9: #{model_forward.12} parent=5 // pred_check
      _
    $region10: #{model_forward.12} parent=5 // pred_check_branch
      %144 = sbr.rel (%p141) target = $region12
    $region11: #{model_forward.12} parent=5 // pred_region
      %s145 = ssub.s32 %s9, 1
    $region12: #{model_forward.12} parent=5 // pred_fallthru
      _
    %p146 = scmp.lt.s32.totalorder %s9, 5
    // Predicated region
    $region13: #{model_forward.12} parent=5 // pred_check
      %p147 = pneg %p146
    $region14: #{model_forward.12} parent=5 // pred_check_branch
      %149 = sbr.rel (%p147) target = $region16
    $region15: #{model_forward.12} parent=5 // pred_region
      // Predicated region
      $region17: #{model_forward.12} parent=15 // pred_check
        %p150 = pneg %p43
      $region18: #{model_forward.12} parent=15 // pred_check_branch
        %152 = sbr.rel (%p150) target = $region20
      $region19: #{model_forward.12} parent=15 // pred_region
        %p153 = scmp.lt.s32.totalorder %s16, 0
        %s154 = scalar_select %p153, %s16, 0
        %p155 = scmp.lt.s32.totalorder %s17, 4
        %s156 = scalar_select %p155, %s17, 4
        %s157 = smul.addr %s154, 5
        %s158 = sadd.s32 %s156, %s157
        %s159 = smul.addr %s158, 4
        %s160 = scalar_lea.vmem %s0, %s159
      $region20: #{model_forward.12} parent=15 // pred_fallthru
        _
      // Predicated region
      $region21: #{model_forward.12} parent=15 // pred_check
        %p161 = pneg %p71
      $region22: #{model_forward.12} parent=15 // pred_check_branch
        %163 = sbr.rel (%p161) target = $region24
      $region23: #{model_forward.12} parent=15 // pred_region
        %p164 = scmp.lt.s32.totalorder %s16, 0
        %s165 = scalar_select %p164, %s16, 0
        %p166 = scmp.lt.s32.totalorder %s17, 4
        %s167 = scalar_select %p166, %s17, 4
        %s168 = smul.addr %s165, 5
        %s169 = sadd.s32 %s167, %s168
        %s170 = smul.addr %s169, 4
        %s171 = scalar_lea.vmem %s1, %s170
      $region24: #{model_forward.12} parent=15 // pred_fallthru
        _
      // Predicated region
      $region25: #{model_forward.12} parent=15 // pred_check
        %p172 = pneg %p97
      $region26: #{model_forward.12} parent=15 // pred_check_branch
        %174 = sbr.rel (%p172) target = $region28
      $region27: #{model_forward.12} parent=15 // pred_region
        %p175 = scmp.lt.s32.totalorder %s17, 4
        %s176 = scalar_select %p175, %s17, 4
        %s177 = smul.addr %s176, 8
        %s178 = scalar_lea.vmem %s2, %s177
      $region28: #{model_forward.12} parent=15 // pred_fallthru
        _
    $region16: #{model_forward.12} parent=5 // pred_fallthru
      _
    %p179 = scmp.le.s32.totalorder 1, %s9
    %p180 = scmp.lt.s32.totalorder %s9, 6
    %p181 = pnand %p179, %p180
    %p182 = pneg %p181
    // Predicated region
    $region29: #{model_forward.12} parent=5 // pred_check
      _
    $region30: #{model_forward.12} parent=5 // pred_check_branch
      %184 = sbr.rel (%p181) target = $region32
    $region31: #{model_forward.12} parent=5 // pred_region
      %s185 = ssub.s32 %s9, 1
      %p186 = scmp.lt.s32.totalorder %s18, 0
      %s187 = scalar_select %p186, %s18, 0
      %p188 = scmp.lt.s32.totalorder %s19, 4
      %s189 = scalar_select %p188, %s19, 4
      %s190 = smul.addr %s187, 5
      %s191 = sadd.s32 %s189, %s190
      %s192 = smul.addr %s191, 4
      %s193 = scalar_lea.vmem %s0, %s192
      %p194 = pneg %p49
      %p195 = pneg %p46
      %p196 = scmp.lt.s32.totalorder %s18, 0
      %s197 = scalar_select %p196, %s18, 0
      %p198 = scmp.lt.s32.totalorder %s19, 4
      %s199 = scalar_select %p198, %s19, 4
      %s200 = smul.addr %s197, 5
      %s201 = sadd.s32 %s199, %s200
      %s202 = smul.addr %s201, 4
      %s203 = scalar_lea.vmem %s1, %s202
      %p204 = pneg %p77
      %p205 = pneg %p74
      %p206 = scmp.lt.s32.totalorder %s19, 4
      %s207 = scalar_select %p206, %s19, 4
      %s208 = smul.addr %s207, 8
      %s209 = scalar_lea.vmem %s2, %s208
      %p210 = pneg %p103
      %p211 = pneg %p100
      %p212 = pneg %p131
      %p213 = pneg %p128
      %p214 = scmp.lt.s32.totalorder %s18, 0
      %s215 = scalar_select %p214, %s18, 0
      %p216 = scmp.lt.s32.totalorder %s19, 4
      %s217 = scalar_select %p216, %s19, 4
      %s218 = smul.addr %s215, 5
      %s219 = sadd.s32 %s217, %s218
      %s220 = smul.addr %s219, 4
      %s221 = scalar_lea.vmem %s3, %s220
      %p222 = scmp.lt.s32.totalorder %s18, 0
      %s223 = scalar_select %p222, %s18, 0
      %p224 = scmp.lt.s32.totalorder %s19, 4
      %s225 = scalar_select %p224, %s19, 4
      %s226 = smul.addr %s223, 5
      %s227 = sadd.s32 %s225, %s226
      %s228 = smul.addr %s227, 4
      %s229 = scalar_lea.vmem %s0, %s228
      %p230 = scmp.lt.s32.totalorder %s18, 0
      %s231 = scalar_select %p230, %s18, 0
      %p232 = scmp.lt.s32.totalorder %s19, 4
      %s233 = scalar_select %p232, %s19, 4
      %s234 = smul.addr %s231, 5
      %s235 = sadd.s32 %s233, %s234
      %s236 = smul.addr %s235, 4
      %s237 = scalar_lea.vmem %s1, %s236
      %p238 = scmp.lt.s32.totalorder %s19, 4
      %s239 = scalar_select %p238, %s19, 4
      %s240 = smul.addr %s239, 8
      %s241 = scalar_lea.vmem %s2, %s240
      %p242 = scmp.lt.s32.totalorder %s18, 0
      %s243 = scalar_select %p242, %s18, 0
      %p244 = scmp.lt.s32.totalorder %s19, 4
      %s245 = scalar_select %p244, %s19, 4
      %s246 = smul.addr %s243, 5
      %s247 = sadd.s32 %s245, %s246
      %s248 = smul.addr %s247, 4
      %s249 = scalar_lea.vmem %s3, %s248
      %v250 = vld [vmem:[%s229] sm:$0xf]
      %v251 = vunpack.c.l.bf16 %v250
      %v252 = vld [vmem:[%s237] sm:$0xf]
      %v253 = vunpack.c.l.bf16 %v252
      %v254 = vld [vmem:[%s241] sm:$0xff]
      %v255 = vlaneseq
      %v256 = vshrl.u32 %v255, 7
      %v257 = vsub.s32 1, %v256
      %v258 = vrot.slane %v254, %v257
      %v259 = vmul.f32 %v258, %v251
      %v260 = vlaneseq
      %v261 = vshrl.u32 %v260, 7
      %v262 = vsub.s32 0, %v261
      %v263 = vrot.slane %v254, %v262
      %v264 = vadd.f32 %v263, %v259
      %v265 = vlaneseq
      %v266 = vshrl.u32 %v265, 7
      %v267 = vsub.s32 2, %v266
      %v268 = vrot.slane %v254, %v267
      %v269 = vmul.f32 %v268, %v253
      %v270 = vadd.f32 %v264, %v269
      %v271 = vmul.f32 %v251, %v253
      %v272 = vlaneseq
      %v273 = vshrl.u32 %v272, 7
      %v274 = vsub.s32 3, %v273
      %v275 = vrot.slane %v254, %v274
      %v276 = vmul.f32 %v275, %v271
      %v277 = vadd.f32 %v270, %v276
      %v278 = vpack.c.bf16 %v277, %v277
      %279 = vst [vmem:[%s249] sm:$0xf] %v278
      %p280 = scmp.lt.s32.totalorder %s18, 0
      %s281 = scalar_select %p280, %s18, 0
      %p282 = scmp.lt.s32.totalorder %s19, 4
      %s283 = scalar_select %p282, %s19, 4
      %s284 = smul.addr %s281, 5
      %s285 = sadd.s32 %s283, %s284
      %s286 = smul.addr %s285, 4
      %s287 = scalar_lea.vmem %s3, %s286
      // Predicated region
      $region33: #{model_forward.12} parent=31 // pred_check
        %p288 = pneg %p128
      $region34: #{model_forward.12} parent=31 // pred_check_branch
        %290 = sbr.rel (%p288) target = $region36
      $region35: #{model_forward.12} parent=31 // pred_region
        _
      $region36: #{model_forward.12} parent=31 // pred_fallthru
        _
    $region32: #{model_forward.12} parent=5 // pred_fallthru
      _
    %p291 = scmp.le.s32.totalorder 2, %s9
    // Predicated region
    $region37: #{model_forward.12} parent=5 // pred_check
      %p292 = pneg %p291
    $region38: #{model_forward.12} parent=5 // pred_check_branch
      %294 = sbr.rel (%p292) target = $region40
    $region39: #{model_forward.12} parent=5 // pred_region
      %s295 = ssub.s32 %s9, 2
      // Predicated region
      $region41: #{model_forward.12} parent=39 // pred_check
        %p296 = pneg %p134
      $region42: #{model_forward.12} parent=39 // pred_check_branch
        %298 = sbr.rel (%p296) target = $region44
      $region43: #{model_forward.12} parent=39 // pred_region
        %p299 = scmp.lt.s32.totalorder %s20, 0
        %s300 = scalar_select %p299, %s20, 0
        %p301 = scmp.lt.s32.totalorder %s21, 4
        %s302 = scalar_select %p301, %s21, 4
        %s303 = smul.addr %s300, 5
        %s304 = sadd.s32 %s302, %s303
        %s305 = smul.addr %s304, 4
        %s306 = scalar_lea.vmem %s3, %s305
      $region44: #{model_forward.12} parent=39 // pred_fallthru
        _
    $region40: #{model_forward.12} parent=5 // pred_fallthru
      _
  $region6: #{model_forward.12} parent=0 // loop_footer
    %s13 = sadd.s32 1, %s9
  $region7: #{model_forward.12} parent=0 // loop_footer_branch
    %8 = sbr.rel target = $region3
  $region8: #{model_forward.12} parent=0 // loop_exit
    _

// kernel: model_forward.13
$region0: #{model_forward.13}
  #allocation0 [shape = 'u32[]', space=smem, size = 0x4, offset = 0x4, fixed_abs, tag = 'smem constant byte address 0x4 - core index']
  #allocation1 [shape = 'u32[144,128]{1,0:T(1,128)}', space=vmem, size = 0x12000, scoped, tag = 'internal scratch']
  %s0 = inlined_call_operand.vmem [shape: bf16[8,384], index: 0, kind: input, shape index: {}]
  %s1 = inlined_call_operand.vmem [shape: bf16[8,384], index: 1, kind: input, shape index: {}]
  %s2 = inlined_call_operand.vmem [shape: f32[8,384], index: 2, kind: input, shape index: {}]
  %s3 = inlined_call_operand.vmem [shape: f32[384,128], index: 3, kind: input, shape index: {}]
  %s4 = inlined_call_operand.vmem [shape: f32[8,128], index: 4, kind: output, shape index: {}]
  %s5 = sld [smem:[#allocation0]]
  $region30: #{model_forward.13} parent=0
    _
  %s7 = ssub.s32 1, %s5
  %s8 = scalar_select 0, %s7, %s5
  // Predicated region
  $region2: #{model_forward.13} parent=0 // pred_check
    _
  $region3: #{model_forward.13} parent=0 // pred_check_branch
    %10 = sbr.rel (0) target = $region5
  $region4: #{model_forward.13} parent=0 // pred_region
    _
  $region5: #{model_forward.13} parent=0 // pred_fallthru
    _
  // Predicated region
  $region6: #{model_forward.13} parent=0 // pred_check
    _
  $region7: #{model_forward.13} parent=0 // pred_check_branch
    %12 = sbr.rel (0) target = $region9
  $region8: #{model_forward.13} parent=0 // pred_region
    _
  $region9: #{model_forward.13} parent=0 // pred_fallthru
    _
  // Predicated region
  $region10: #{model_forward.13} parent=0 // pred_check
    _
  $region11: #{model_forward.13} parent=0 // pred_check_branch
    %14 = sbr.rel (0) target = $region13
  $region12: #{model_forward.13} parent=0 // pred_region
    _
  $region13: #{model_forward.13} parent=0 // pred_fallthru
    _
  // Predicated region
  $region14: #{model_forward.13} parent=0 // pred_check
    _
  $region15: #{model_forward.13} parent=0 // pred_check_branch
    %16 = sbr.rel (0) target = $region17
  $region16: #{model_forward.13} parent=0 // pred_region
    _
  $region17: #{model_forward.13} parent=0 // pred_fallthru
    _
  %p17 = scmp.eq.s32.totalorder 0, 0
  // Predicated region
  $region18: #{model_forward.13} parent=0 // pred_check
    %p18 = pneg %p17
  $region19: #{model_forward.13} parent=0 // pred_check_branch
    %20 = sbr.rel (%p18) target = $region21
  $region20: #{model_forward.13} parent=0 // pred_region
    %21 = vst [vmem:[%s4] sm:$0xff] 0.0
  $region21: #{model_forward.13} parent=0 // pred_fallthru
    _
  %v22 = vld [vmem:[%s0] sm:$0xff]
  %v23 = vld [vmem:[%s0 + $0x8] sm:$0xf]
  %v24 = vunpack.c.l.bf16 %v22
  %v25 = vunpack.c.h.bf16 %v22
  %v26 = vunpack.c.l.bf16 %v23
  %v27 = vld [vmem:[%s1] sm:$0xff]
  %v28 = vld [vmem:[%s1 + $0x8] sm:$0xf]
  %v29 = vunpack.c.l.bf16 %v27
  %v30 = vunpack.c.h.bf16 %v27
  %v31 = vunpack.c.l.bf16 %v28
  %v32 = vld [vmem:[%s2] sm:$0xff]
  %v33 = vld [vmem:[%s2 + $0x8] sm:$0xff]
  %v34 = vld [vmem:[%s2 + $0x10] sm:$0xff]
  %v35 = vlaneseq
  %v36 = vshrl.u32 %v35, 7
  %v37 = vsub.s32 1, %v36
  %v38 = vrot.slane %v32, %v37
  %v39 = vlaneseq
  %v40 = vshrl.u32 %v39, 7
  %v41 = vsub.s32 1, %v40
  %v42 = vrot.slane %v33, %v41
  %v43 = vlaneseq
  %v44 = vshrl.u32 %v43, 7
  %v45 = vsub.s32 1, %v44
  %v46 = vrot.slane %v34, %v45
  %v47 = vmul.f32 %v38, %v24
  %v48 = vmul.f32 %v42, %v25
  %v49 = vmul.f32 %v46, %v26
  %v50 = vlaneseq
  %v51 = vshrl.u32 %v50, 7
  %v52 = vsub.s32 0, %v51
  %v53 = vrot.slane %v32, %v52
  %v54 = vlaneseq
  %v55 = vshrl.u32 %v54, 7
  %v56 = vsub.s32 0, %v55
  %v57 = vrot.slane %v33, %v56
  %v58 = vlaneseq
  %v59 = vshrl.u32 %v58, 7
  %v60 = vsub.s32 0, %v59
  %v61 = vrot.slane %v34, %v60
  %v62 = vadd.f32 %v53, %v47
  %v63 = vadd.f32 %v57, %v48
  %v64 = vadd.f32 %v61, %v49
  %v65 = vlaneseq
  %v66 = vshrl.u32 %v65, 7
  %v67 = vsub.s32 2, %v66
  %v68 = vrot.slane %v32, %v67
  %v69 = vlaneseq
  %v70 = vshrl.u32 %v69, 7
  %v71 = vsub.s32 2, %v70
  %v72 = vrot.slane %v33, %v71
  %v73 = vlaneseq
  %v74 = vshrl.u32 %v73, 7
  %v75 = vsub.s32 2, %v74
  %v76 = vrot.slane %v34, %v75
  %v77 = vmul.f32 %v68, %v29
  %v78 = vmul.f32 %v72, %v30
  %v79 = vmul.f32 %v76, %v31
  %v80 = vadd.f32 %v62, %v77
  %v81 = vadd.f32 %v63, %v78
  %v82 = vadd.f32 %v64, %v79
  %v83 = vmul.f32 %v24, %v29
  %v84 = vmul.f32 %v25, %v30
  %v85 = vmul.f32 %v26, %v31
  %v86 = vlaneseq
  %v87 = vshrl.u32 %v86, 7
  %v88 = vsub.s32 3, %v87
  %v89 = vrot.slane %v32, %v88
  %v90 = vlaneseq
  %v91 = vshrl.u32 %v90, 7
  %v92 = vsub.s32 3, %v91
  %v93 = vrot.slane %v33, %v92
  %v94 = vlaneseq
  %v95 = vshrl.u32 %v94, 7
  %v96 = vsub.s32 3, %v95
  %v97 = vrot.slane %v34, %v96
  %v98 = vmul.f32 %v89, %v83
  %v99 = vmul.f32 %v93, %v84
  %v100 = vmul.f32 %v97, %v85
  %v101 = vadd.f32 %v80, %v98
  %v102 = vadd.f32 %v81, %v99
  %v103 = vadd.f32 %v82, %v100
  %v104 = vld [vmem:[%s4] sm:$0xff]
  %v105 = vld [vmem:[%s3] sm:$0xff]
  %v106 = vld [vmem:[%s3 + $0x8] sm:$0xff]
  %v107 = vld [vmem:[%s3 + $0x10] sm:$0xff]
  %v108 = vld [vmem:[%s3 + $0x18] sm:$0xff]
  %v109 = vld [vmem:[%s3 + $0x20] sm:$0xff]
  %v110 = vld [vmem:[%s3 + $0x28] sm:$0xff]
  %v111 = vld [vmem:[%s3 + $0x30] sm:$0xff]
  %v112 = vld [vmem:[%s3 + $0x38] sm:$0xff]
  %v113 = vld [vmem:[%s3 + $0x40] sm:$0xff]
  %v114 = vld [vmem:[%s3 + $0x48] sm:$0xff]
  %v115 = vld [vmem:[%s3 + $0x50] sm:$0xff]
  %v116 = vld [vmem:[%s3 + $0x58] sm:$0xff]
  %v117 = vld [vmem:[%s3 + $0x60] sm:$0xff]
  %v118 = vld [vmem:[%s3 + $0x68] sm:$0xff]
  %v119 = vld [vmem:[%s3 + $0x70] sm:$0xff]
  %v120 = vld [vmem:[%s3 + $0x78] sm:$0xff]
  %v121 = vld [vmem:[%s3 + $0x80] sm:$0xff]
  %v122 = vld [vmem:[%s3 + $0x88] sm:$0xff]
  %v123 = vld [vmem:[%s3 + $0x90] sm:$0xff]
  %v124 = vld [vmem:[%s3 + $0x98] sm:$0xff]
  %v125 = vld [vmem:[%s3 + $0xa0] sm:$0xff]
  %v126 = vld [vmem:[%s3 + $0xa8] sm:$0xff]
  %v127 = vld [vmem:[%s3 + $0xb0] sm:$0xff]
  %v128 = vld [vmem:[%s3 + $0xb8] sm:$0xff]
  %v129 = vld [vmem:[%s3 + $0xc0] sm:$0xff]
  %v130 = vld [vmem:[%s3 + $0xc8] sm:$0xff]
  %v131 = vld [vmem:[%s3 + $0xd0] sm:$0xff]
  %v132 = vld [vmem:[%s3 + $0xd8] sm:$0xff]
  %v133 = vld [vmem:[%s3 + $0xe0] sm:$0xff]
  %v134 = vld [vmem:[%s3 + $0xe8] sm:$0xff]
  %v135 = vld [vmem:[%s3 + $0xf0] sm:$0xff]
  %v136 = vld [vmem:[%s3 + $0xf8] sm:$0xff]
  %v137 = vld [vmem:[%s3 + $0x100] sm:$0xff]
  %v138 = vld [vmem:[%s3 + $0x108] sm:$0xff]
  %v139 = vld [vmem:[%s3 + $0x110] sm:$0xff]
  %v140 = vld [vmem:[%s3 + $0x118] sm:$0xff]
  %v141 = vld [vmem:[%s3 + $0x120] sm:$0xff]
  %v142 = vld [vmem:[%s3 + $0x128] sm:$0xff]
  %v143 = vld [vmem:[%s3 + $0x130] sm:$0xff]
  %v144 = vld [vmem:[%s3 + $0x138] sm:$0xff]
  %v145 = vld [vmem:[%s3 + $0x140] sm:$0xff]
  %v146 = vld [vmem:[%s3 + $0x148] sm:$0xff]
  %v147 = vld [vmem:[%s3 + $0x150] sm:$0xff]
  %v148 = vld [vmem:[%s3 + $0x158] sm:$0xff]
  %v149 = vld [vmem:[%s3 + $0x160] sm:$0xff]
  %v150 = vld [vmem:[%s3 + $0x168] sm:$0xff]
  %v151 = vld [vmem:[%s3 + $0x170] sm:$0xff]
  %v152 = vld [vmem:[%s3 + $0x178] sm:$0xff]
  %153 = vmatprep.subr.mxu0 0.0
  %v154 = vand.u32 %v120, 4294901760
  %155 = vmatpush1.msra.mxu0 %v154
  %156 = vmatprep.subr.mxu0 0.0
  %v157 = vand.u32 %v119, 4294901760
  %158 = vmatpush1.msra.mxu0 %v157
  %159 = vmatprep.subr.mxu0 0.0
  %v160 = vand.u32 %v118, 4294901760
  %161 = vmatpush1.msra.mxu0 %v160
  %162 = vmatprep.subr.mxu0 0.0
  %v163 = vand.u32 %v117, 4294901760
  %164 = vmatpush1.msra.mxu0 %v163
  %165 = vmatprep.subr.mxu0 0.0
  %v166 = vand.u32 %v116, 4294901760
  %167 = vmatpush1.msra.mxu0 %v166
  %168 = vmatprep.subr.mxu0 0.0
  %v169 = vand.u32 %v115, 4294901760
  %170 = vmatpush1.msra.mxu0 %v169
  %171 = vmatprep.subr.mxu0 0.0
  %v172 = vand.u32 %v114, 4294901760
  %173 = vmatpush1.msra.mxu0 %v172
  %174 = vmatprep.subr.mxu0 0.0
  %v175 = vand.u32 %v113, 4294901760
  %176 = vmatpush1.msra.mxu0 %v175
  %177 = vmatprep.subr.mxu0 0.0
  %v178 = vand.u32 %v112, 4294901760
  %179 = vmatpush1.msra.mxu0 %v178
  %180 = vmatprep.subr.mxu0 0.0
  %v181 = vand.u32 %v111, 4294901760
  %182 = vmatpush1.msra.mxu0 %v181
  %183 = vmatprep.subr.mxu0 0.0
  %v184 = vand.u32 %v110, 4294901760
  %185 = vmatpush1.msra.mxu0 %v184
  %186 = vmatprep.subr.mxu0 0.0
  %v187 = vand.u32 %v109, 4294901760
  %188 = vmatpush1.msra.mxu0 %v187
  %189 = vmatprep.subr.mxu0 0.0
  %v190 = vand.u32 %v108, 4294901760
  %191 = vmatpush1.msra.mxu0 %v190
  %192 = vmatprep.subr.mxu0 0.0
  %v193 = vand.u32 %v107, 4294901760
  %194 = vmatpush1.msra.mxu0 %v193
  %195 = vmatprep.subr.mxu0 0.0
  %v196 = vand.u32 %v106, 4294901760
  %197 = vmatpush1.msra.mxu0 %v196
  %198 = vmatprep.subr.mxu0 0.0
  %v199 = vand.u32 %v105, 4294901760
  %200 = vmatpush1.msra.mxu0 %v199
  %201 = vmatprep.subr.mxu0 0.0
  %v202 = vand.u32 %v136, 4294901760
  %203 = vmatpush2.msra.mxu0 %v202
  %204 = vmatprep.subr.mxu0 0.0
  %v205 = vand.u32 %v135, 4294901760
  %206 = vmatpush2.msra.mxu0 %v205
  %207 = vmatprep.subr.mxu0 0.0
  %v208 = vand.u32 %v134, 4294901760
  %209 = vmatpush2.msra.mxu0 %v208
  %210 = vmatprep.subr.mxu0 0.0
  %v211 = vand.u32 %v133, 4294901760
  %212 = vmatpush2.msra.mxu0 %v211
  %213 = vmatprep.subr.mxu0 0.0
  %v214 = vand.u32 %v132, 4294901760
  %215 = vmatpush2.msra.mxu0 %v214
  %216 = vmatprep.subr.mxu0 0.0
  %v217 = vand.u32 %v131, 4294901760
  %218 = vmatpush2.msra.mxu0 %v217
  %219 = vmatprep.subr.mxu0 0.0
  %v220 = vand.u32 %v130, 4294901760
  %221 = vmatpush2.msra.mxu0 %v220
  %222 = vmatprep.subr.mxu0 0.0
  %v223 = vand.u32 %v129, 4294901760
  %224 = vmatpush2.msra.mxu0 %v223
  %225 = vmatprep.subr.mxu0 0.0
  %v226 = vand.u32 %v128, 4294901760
  %227 = vmatpush2.msra.mxu0 %v226
  %228 = vmatprep.subr.mxu0 0.0
  %v229 = vand.u32 %v127, 4294901760
  %230 = vmatpush2.msra.mxu0 %v229
  %231 = vmatprep.subr.mxu0 0.0
  %v232 = vand.u32 %v126, 4294901760
  %233 = vmatpush2.msra.mxu0 %v232
  %234 = vmatprep.subr.mxu0 0.0
  %v235 = vand.u32 %v125, 4294901760
  %236 = vmatpush2.msra.mxu0 %v235
  %237 = vmatprep.subr.mxu0 0.0
  %v238 = vand.u32 %v124, 4294901760
  %239 = vmatpush2.msra.mxu0 %v238
  %240 = vmatprep.subr.mxu0 0.0
  %v241 = vand.u32 %v123, 4294901760
  %242 = vmatpush2.msra.mxu0 %v241
  %243 = vmatprep.subr.mxu0 0.0
  %v244 = vand.u32 %v122, 4294901760
  %245 = vmatpush2.msra.mxu0 %v244
  %246 = vmatprep.subr.mxu0 0.0
  %v247 = vand.u32 %v121, 4294901760
  %248 = vmatpush2.msra.mxu0 %v247
  %v249 = vand.u32 %v102, 4294901760
  %v250 = vsub.f32 %v102, %v249
  %v251 = vand.u32 %v250, 4294901760
  %v252 = vsub.f32 %v250, %v251
  %v253 = vand.u32 %v252, 4294901760
  %254 = vmatprep.mubr.f32.mxu0 %v253
  %v255 = vand.u32 %v101, 4294901760
  %v256 = vsub.f32 %v101, %v255
  %v257 = vand.u32 %v256, 4294901760
  %v258 = vsub.f32 %v256, %v257
  %v259 = vand.u32 %v258, 4294901760
  %260 = vmatmul.mubr.f32.gmra.mxu0 %v259
  %v261 = vpop.f32.mrf.mxu0
  %v262 = vadd.f32 0.0, %v261
  %v263 = vpop.f32.mrf.mxu0
  %264 = vdwg.mxu0
  %265 = vmatprep.subr.mxu0 0.0
  %v266 = vand.u32 %v120, 4294901760
  %v267 = vsub.f32 %v120, %v266
  %v268 = vand.u32 %v267, 4294901760
  %v269 = vsub.f32 %v267, %v268
  %v270 = vand.u32 %v269, 4294901760
  %271 = vmatpush1.msra.mxu0 %v270
  %272 = vmatprep.subr.mxu0 0.0
  %v273 = vand.u32 %v119, 4294901760
  %v274 = vsub.f32 %v119, %v273
  %v275 = vand.u32 %v274, 4294901760
  %v276 = vsub.f32 %v274, %v275
  %v277 = vand.u32 %v276, 4294901760
  %278 = vmatpush1.msra.mxu0 %v277
  %279 = vmatprep.subr.mxu0 0.0
  %v280 = vand.u32 %v118, 4294901760
  %v281 = vsub.f32 %v118, %v280
  %v282 = vand.u32 %v281, 4294901760
  %v283 = vsub.f32 %v281, %v282
  %v284 = vand.u32 %v283, 4294901760
  %285 = vmatpush1.msra.mxu0 %v284
  %286 = vmatprep.subr.mxu0 0.0
  %v287 = vand.u32 %v117, 4294901760
  %v288 = vsub.f32 %v117, %v287
  %v289 = vand.u32 %v288, 4294901760
  %v290 = vsub.f32 %v288, %v289
  %v291 = vand.u32 %v290, 4294901760
  %292 = vmatpush1.msra.mxu0 %v291
  %293 = vmatprep.subr.mxu0 0.0
  %v294 = vand.u32 %v116, 4294901760
  %v295 = vsub.f32 %v116, %v294
  %v296 = vand.u32 %v295, 4294901760
  %v297 = vsub.f32 %v295, %v296
  %v298 = vand.u32 %v297, 4294901760
  %299 = vmatpush1.msra.mxu0 %v298
  %300 = vmatprep.subr.mxu0 0.0
  %v301 = vand.u32 %v115, 4294901760
  %v302 = vsub.f32 %v115, %v301
  %v303 = vand.u32 %v302, 4294901760
  %v304 = vsub.f32 %v302, %v303
  %v305 = vand.u32 %v304, 4294901760
  %306 = vmatpush1.msra.mxu0 %v305
  %307 = vmatprep.subr.mxu0 0.0
  %v308 = vand.u32 %v114, 4294901760
  %v309 = vsub.f32 %v114, %v308
  %v310 = vand.u32 %v309, 4294901760
  %v311 = vsub.f32 %v309, %v310
  %v312 = vand.u32 %v311, 4294901760
  %313 = vmatpush1.msra.mxu0 %v312
  %314 = vmatprep.subr.mxu0 0.0
  %v315 = vand.u32 %v113, 4294901760
  %v316 = vsub.f32 %v113, %v315
  %v317 = vand.u32 %v316, 4294901760
  %v318 = vsub.f32 %v316, %v317
  %v319 = vand.u32 %v318, 4294901760
  %320 = vmatpush1.msra.mxu0 %v319
  %321 = vmatprep.subr.mxu0 0.0
  %v322 = vand.u32 %v112, 4294901760
  %v323 = vsub.f32 %v112, %v322
  %v324 = vand.u32 %v323, 4294901760
  %v325 = vsub.f32 %v323, %v324
  %v326 = vand.u32 %v325, 4294901760
  %327 = vmatpush1.msra.mxu0 %v326
  %328 = vmatprep.subr.mxu0 0.0
  %v329 = vand.u32 %v111, 4294901760
  %v330 = vsub.f32 %v111, %v329
  %v331 = vand.u32 %v330, 4294901760
  %v332 = vsub.f32 %v330, %v331
  %v333 = vand.u32 %v332, 4294901760
  %334 = vmatpush1.msra.mxu0 %v333
  %335 = vmatprep.subr.mxu0 0.0
  %v336 = vand.u32 %v110, 4294901760
  %v337 = vsub.f32 %v110, %v336
  %v338 = vand.u32 %v337, 4294901760
  %v339 = vsub.f32 %v337, %v338
  %v340 = vand.u32 %v339, 4294901760
  %341 = vmatpush1.msra.mxu0 %v340
  %342 = vmatprep.subr.mxu0 0.0
  %v343 = vand.u32 %v109, 4294901760
  %v344 = vsub.f32 %v109, %v343
  %v345 = vand.u32 %v344, 4294901760
  %v346 = vsub.f32 %v344, %v345
  %v347 = vand.u32 %v346, 4294901760
  %348 = vmatpush1.msra.mxu0 %v347
  %349 = vmatprep.subr.mxu0 0.0
  %v350 = vand.u32 %v108, 4294901760
  %v351 = vsub.f32 %v108, %v350
  %v352 = vand.u32 %v351, 4294901760
  %v353 = vsub.f32 %v351, %v352
  %v354 = vand.u32 %v353, 4294901760
  %355 = vmatpush1.msra.mxu0 %v354
  %356 = vmatprep.subr.mxu0 0.0
  %v357 = vand.u32 %v107, 4294901760
  %v358 = vsub.f32 %v107, %v357
  %v359 = vand.u32 %v358, 4294901760
  %v360 = vsub.f32 %v358, %v359
  %v361 = vand.u32 %v360, 4294901760
  %362 = vmatpush1.msra.mxu0 %v361
  %363 = vmatprep.subr.mxu0 0.0
  %v364 = vand.u32 %v106, 4294901760
  %v365 = vsub.f32 %v106, %v364
  %v366 = vand.u32 %v365, 4294901760
  %v367 = vsub.f32 %v365, %v366
  %v368 = vand.u32 %v367, 4294901760
  %369 = vmatpush1.msra.mxu0 %v368
  %370 = vmatprep.subr.mxu0 0.0
  %v371 = vand.u32 %v105, 4294901760
  %v372 = vsub.f32 %v105, %v371
  %v373 = vand.u32 %v372, 4294901760
  %v374 = vsub.f32 %v372, %v373
  %v375 = vand.u32 %v374, 4294901760
  %376 = vmatpush1.msra.mxu0 %v375
  %377 = vmatprep.subr.mxu0 0.0
  %v378 = vand.u32 %v136, 4294901760
  %v379 = vsub.f32 %v136, %v378
  %v380 = vand.u32 %v379, 4294901760
  %v381 = vsub.f32 %v379, %v380
  %v382 = vand.u32 %v381, 4294901760
  %383 = vmatpush2.msra.mxu0 %v382
  %384 = vmatprep.subr.mxu0 0.0
  %v385 = vand.u32 %v135, 4294901760
  %v386 = vsub.f32 %v135, %v385
  %v387 = vand.u32 %v386, 4294901760
  %v388 = vsub.f32 %v386, %v387
  %v389 = vand.u32 %v388, 4294901760
  %390 = vmatpush2.msra.mxu0 %v389
  %391 = vmatprep.subr.mxu0 0.0
  %v392 = vand.u32 %v134, 4294901760
  %v393 = vsub.f32 %v134, %v392
  %v394 = vand.u32 %v393, 4294901760
  %v395 = vsub.f32 %v393, %v394
  %v396 = vand.u32 %v395, 4294901760
  %397 = vmatpush2.msra.mxu0 %v396
  %398 = vmatprep.subr.mxu0 0.0
  %v399 = vand.u32 %v133, 4294901760
  %v400 = vsub.f32 %v133, %v399
  %v401 = vand.u32 %v400, 4294901760
  %v402 = vsub.f32 %v400, %v401
  %v403 = vand.u32 %v402, 4294901760
  %404 = vmatpush2.msra.mxu0 %v403
  %405 = vmatprep.subr.mxu0 0.0
  %v406 = vand.u32 %v132, 4294901760
  %v407 = vsub.f32 %v132, %v406
  %v408 = vand.u32 %v407, 4294901760
  %v409 = vsub.f32 %v407, %v408
  %v410 = vand.u32 %v409, 4294901760
  %411 = vmatpush2.msra.mxu0 %v410
  %412 = vmatprep.subr.mxu0 0.0
  %v413 = vand.u32 %v131, 4294901760
  %v414 = vsub.f32 %v131, %v413
  %v415 = vand.u32 %v414, 4294901760
  %v416 = vsub.f32 %v414, %v415
  %v417 = vand.u32 %v416, 4294901760
  %418 = vmatpush2.msra.mxu0 %v417
  %419 = vmatprep.subr.mxu0 0.0
  %v420 = vand.u32 %v130, 4294901760
  %v421 = vsub.f32 %v130, %v420
  %v422 = vand.u32 %v421, 4294901760
  %v423 = vsub.f32 %v421, %v422
  %v424 = vand.u32 %v423, 4294901760
  %425 = vmatpush2.msra.mxu0 %v424
  %426 = vmatprep.subr.mxu0 0.0
  %v427 = vand.u32 %v129, 4294901760
  %v428 = vsub.f32 %v129, %v427
  %v429 = vand.u32 %v428, 4294901760
  %v430 = vsub.f32 %v428, %v429
  %v431 = vand.u32 %v430, 4294901760
  %432 = vmatpush2.msra.mxu0 %v431
  %433 = vmatprep.subr.mxu0 0.0
  %v434 = vand.u32 %v128, 4294901760
  %v435 = vsub.f32 %v128, %v434
  %v436 = vand.u32 %v435, 4294901760
  %v437 = vsub.f32 %v435, %v436
  %v438 = vand.u32 %v437, 4294901760
  %439 = vmatpush2.msra.mxu0 %v438
  %440 = vmatprep.subr.mxu0 0.0
  %v441 = vand.u32 %v127, 4294901760
  %v442 = vsub.f32 %v127, %v441
  %v443 = vand.u32 %v442, 4294901760
  %v444 = vsub.f32 %v442, %v443
  %v445 = vand.u32 %v444, 4294901760
  %446 = vmatpush2.msra.mxu0 %v445
  %447 = vmatprep.subr.mxu0 0.0
  %v448 = vand.u32 %v126, 4294901760
  %v449 = vsub.f32 %v126, %v448
  %v450 = vand.u32 %v449, 4294901760
  %v451 = vsub.f32 %v449, %v450
  %v452 = vand.u32 %v451, 4294901760
  %453 = vmatpush2.msra.mxu0 %v452
  %454 = vmatprep.subr.mxu0 0.0
  %v455 = vand.u32 %v125, 4294901760
  %v456 = vsub.f32 %v125, %v455
  %v457 = vand.u32 %v456, 4294901760
  %v458 = vsub.f32 %v456, %v457
  %v459 = vand.u32 %v458, 4294901760
  %460 = vmatpush2.msra.mxu0 %v459
  %461 = vmatprep.subr.mxu0 0.0
  %v462 = vand.u32 %v124, 4294901760
  %v463 = vsub.f32 %v124, %v462
  %v464 = vand.u32 %v463, 4294901760
  %v465 = vsub.f32 %v463, %v464
  %v466 = vand.u32 %v465, 4294901760
  %467 = vmatpush2.msra.mxu0 %v466
  %468 = vmatprep.subr.mxu0 0.0
  %v469 = vand.u32 %v123, 4294901760
  %v470 = vsub.f32 %v123, %v469
  %v471 = vand.u32 %v470, 4294901760
  %v472 = vsub.f32 %v470, %v471
  %v473 = vand.u32 %v472, 4294901760
  %474 = vmatpush2.msra.mxu0 %v473
  %475 = vmatprep.subr.mxu0 0.0
  %v476 = vand.u32 %v122, 4294901760
  %v477 = vsub.f32 %v122, %v476
  %v478 = vand.u32 %v477, 4294901760
  %v479 = vsub.f32 %v477, %v478
  %v480 = vand.u32 %v479, 4294901760
  %481 = vmatpush2.msra.mxu0 %v480
  %482 = vmatprep.subr.mxu0 0.0
  %v483 = vand.u32 %v121, 4294901760
  %v484 = vsub.f32 %v121, %v483
  %v485 = vand.u32 %v484, 4294901760
  %v486 = vsub.f32 %v484, %v485
  %v487 = vand.u32 %v486, 4294901760
  %488 = vmatpush2.msra.mxu0 %v487
  %v489 = vand.u32 %v102, 4294901760
  %490 = vmatprep.mubr.f32.mxu0 %v489
  %v491 = vand.u32 %v101, 4294901760
  %492 = vmatmul.mubr.f32.gmra.mxu0 %v491
  %v493 = vpop.f32.mrf.mxu0
  %v494 = vadd.f32 %v262, %v493
  %v495 = vpop.f32.mrf.mxu0
  %496 = vdwg.mxu0
  %497 = vmatprep.subr.mxu0 0.0
  %v498 = vand.u32 %v120, 4294901760
  %v499 = vsub.f32 %v120, %v498
  %500 = vmatpush1.msra.mxu0 %v499
  %501 = vmatprep.subr.mxu0 0.0
  %v502 = vand.u32 %v119, 4294901760
  %v503 = vsub.f32 %v119, %v502
  %504 = vmatpush1.msra.mxu0 %v503
  %505 = vmatprep.subr.mxu0 0.0
  %v506 = vand.u32 %v118, 4294901760
  %v507 = vsub.f32 %v118, %v506
  %508 = vmatpush1.msra.mxu0 %v507
  %509 = vmatprep.subr.mxu0 0.0
  %v510 = vand.u32 %v117, 4294901760
  %v511 = vsub.f32 %v117, %v510
  %512 = vmatpush1.msra.mxu0 %v511
  %513 = vmatprep.subr.mxu0 0.0
  %v514 = vand.u32 %v116, 4294901760
  %v515 = vsub.f32 %v116, %v514
  %516 = vmatpush1.msra.mxu0 %v515
  %517 = vmatprep.subr.mxu0 0.0
  %v518 = vand.u32 %v115, 4294901760
  %v519 = vsub.f32 %v115, %v518
  %520 = vmatpush1.msra.mxu0 %v519
  %521 = vmatprep.subr.mxu0 0.0
  %v522 = vand.u32 %v114, 4294901760
  %v523 = vsub.f32 %v114, %v522
  %524 = vmatpush1.msra.mxu0 %v523
  %525 = vmatprep.subr.mxu0 0.0
  %v526 = vand.u32 %v113, 4294901760
  %v527 = vsub.f32 %v113, %v526
  %528 = vmatpush1.msra.mxu0 %v527
  %529 = vmatprep.subr.mxu0 0.0
  %v530 = vand.u32 %v112, 4294901760
  %v531 = vsub.f32 %v112, %v530
  %532 = vmatpush1.msra.mxu0 %v531
  %533 = vmatprep.subr.mxu0 0.0
  %v534 = vand.u32 %v111, 4294901760
  %v535 = vsub.f32 %v111, %v534
  %536 = vmatpush1.msra.mxu0 %v535
  %537 = vmatprep.subr.mxu0 0.0
  %v538 = vand.u32 %v110, 4294901760
  %v539 = vsub.f32 %v110, %v538
  %540 = vmatpush1.msra.mxu0 %v539
  %541 = vmatprep.subr.mxu0 0.0
  %v542 = vand.u32 %v109, 4294901760
  %v543 = vsub.f32 %v109, %v542
  %544 = vmatpush1.msra.mxu0 %v543
  %545 = vmatprep.subr.mxu0 0.0
  %v546 = vand.u32 %v108, 4294901760
  %v547 = vsub.f32 %v108, %v546
  %548 = vmatpush1.msra.mxu0 %v547
  %549 = vmatprep.subr.mxu0 0.0
  %v550 = vand.u32 %v107, 4294901760
  %v551 = vsub.f32 %v107, %v550
  %552 = vmatpush1.msra.mxu0 %v551
  %553 = vmatprep.subr.mxu0 0.0
  %v554 = vand.u32 %v106, 4294901760
  %v555 = vsub.f32 %v106, %v554
  %556 = vmatpush1.msra.mxu0 %v555
  %557 = vmatprep.subr.mxu0 0.0
  %v558 = vand.u32 %v105, 4294901760
  %v559 = vsub.f32 %v105, %v558
  %560 = vmatpush1.msra.mxu0 %v559
  %561 = vmatprep.subr.mxu0 0.0
  %v562 = vand.u32 %v136, 4294901760
  %v563 = vsub.f32 %v136, %v562
  %564 = vmatpush2.msra.mxu0 %v563
  %565 = vmatprep.subr.mxu0 0.0
  %v566 = vand.u32 %v135, 4294901760
  %v567 = vsub.f32 %v135, %v566
  %568 = vmatpush2.msra.mxu0 %v567
  %569 = vmatprep.subr.mxu0 0.0
  %v570 = vand.u32 %v134, 4294901760
  %v571 = vsub.f32 %v134, %v570
  %572 = vmatpush2.msra.mxu0 %v571
  %573 = vmatprep.subr.mxu0 0.0
  %v574 = vand.u32 %v133, 4294901760
  %v575 = vsub.f32 %v133, %v574
  %576 = vmatpush2.msra.mxu0 %v575
  %577 = vmatprep.subr.mxu0 0.0
  %v578 = vand.u32 %v132, 4294901760
  %v579 = vsub.f32 %v132, %v578
  %580 = vmatpush2.msra.mxu0 %v579
  %581 = vmatprep.subr.mxu0 0.0
  %v582 = vand.u32 %v131, 4294901760
  %v583 = vsub.f32 %v131, %v582
  %584 = vmatpush2.msra.mxu0 %v583
  %585 = vmatprep.subr.mxu0 0.0
  %v586 = vand.u32 %v130, 4294901760
  %v587 = vsub.f32 %v130, %v586
  %588 = vmatpush2.msra.mxu0 %v587
  %589 = vmatprep.subr.mxu0 0.0
  %v590 = vand.u32 %v129, 4294901760
  %v591 = vsub.f32 %v129, %v590
  %592 = vmatpush2.msra.mxu0 %v591
  %593 = vmatprep.subr.mxu0 0.0
  %v594 = vand.u32 %v128, 4294901760
  %v595 = vsub.f32 %v128, %v594
  %596 = vmatpush2.msra.mxu0 %v595
  %597 = vmatprep.subr.mxu0 0.0
  %v598 = vand.u32 %v127, 4294901760
  %v599 = vsub.f32 %v127, %v598
  %600 = vmatpush2.msra.mxu0 %v599
  %601 = vmatprep.subr.mxu0 0.0
  %v602 = vand.u32 %v126, 4294901760
  %v603 = vsub.f32 %v126, %v602
  %604 = vmatpush2.msra.mxu0 %v603
  %605 = vmatprep.subr.mxu0 0.0
  %v606 = vand.u32 %v125, 4294901760
  %v607 = vsub.f32 %v125, %v606
  %608 = vmatpush2.msra.mxu0 %v607
  %609 = vmatprep.subr.mxu0 0.0
  %v610 = vand.u32 %v124, 4294901760
  %v611 = vsub.f32 %v124, %v610
  %612 = vmatpush2.msra.mxu0 %v611
  %613 = vmatprep.subr.mxu0 0.0
  %v614 = vand.u32 %v123, 4294901760
  %v615 = vsub.f32 %v123, %v614
  %616 = vmatpush2.msra.mxu0 %v615
  %617 = vmatprep.subr.mxu0 0.0
  %v618 = vand.u32 %v122, 4294901760
  %v619 = vsub.f32 %v122, %v618
  %620 = vmatpush2.msra.mxu0 %v619
  %621 = vmatprep.subr.mxu0 0.0
  %v622 = vand.u32 %v121, 4294901760
  %v623 = vsub.f32 %v121, %v622
  %624 = vmatpush2.msra.mxu0 %v623
  %v625 = vand.u32 %v102, 4294901760
  %v626 = vsub.f32 %v102, %v625
  %627 = vmatprep.mubr.f32.mxu0 %v626
  %v628 = vand.u32 %v101, 4294901760
  %v629 = vsub.f32 %v101, %v628
  %630 = vmatmul.mubr.f32.gmra.mxu0 %v629
  %v631 = vpop.f32.mrf.mxu0
  %v632 = vadd.f32 %v494, %v631
  %v633 = vpop.f32.mrf.mxu0
  %634 = vdwg.mxu0
  %635 = vmatprep.subr.mxu0 0.0
  %v636 = vand.u32 %v120, 4294901760
  %637 = vmatpush1.msra.mxu0 %v636
  %638 = vmatprep.subr.mxu0 0.0
  %v639 = vand.u32 %v119, 4294901760
  %640 = vmatpush1.msra.mxu0 %v639
  %641 = vmatprep.subr.mxu0 0.0
  %v642 = vand.u32 %v118, 4294901760
  %643 = vmatpush1.msra.mxu0 %v642
  %644 = vmatprep.subr.mxu0 0.0
  %v645 = vand.u32 %v117, 4294901760
  %646 = vmatpush1.msra.mxu0 %v645
  %647 = vmatprep.subr.mxu0 0.0
  %v648 = vand.u32 %v116, 4294901760
  %649 = vmatpush1.msra.mxu0 %v648
  %650 = vmatprep.subr.mxu0 0.0
  %v651 = vand.u32 %v115, 4294901760
  %652 = vmatpush1.msra.mxu0 %v651
  %653 = vmatprep.subr.mxu0 0.0
  %v654 = vand.u32 %v114, 4294901760
  %655 = vmatpush1.msra.mxu0 %v654
  %656 = vmatprep.subr.mxu0 0.0
  %v657 = vand.u32 %v113, 4294901760
  %658 = vmatpush1.msra.mxu0 %v657
  %659 = vmatprep.subr.mxu0 0.0
  %v660 = vand.u32 %v112, 4294901760
  %661 = vmatpush1.msra.mxu0 %v660
  %662 = vmatprep.subr.mxu0 0.0
  %v663 = vand.u32 %v111, 4294901760
  %664 = vmatpush1.msra.mxu0 %v663
  %665 = vmatprep.subr.mxu0 0.0
  %v666 = vand.u32 %v110, 4294901760
  %667 = vmatpush1.msra.mxu0 %v666
  %668 = vmatprep.subr.mxu0 0.0
  %v669 = vand.u32 %v109, 4294901760
  %670 = vmatpush1.msra.mxu0 %v669
  %671 = vmatprep.subr.mxu0 0.0
  %v672 = vand.u32 %v108, 4294901760
  %673 = vmatpush1.msra.mxu0 %v672
  %674 = vmatprep.subr.mxu0 0.0
  %v675 = vand.u32 %v107, 4294901760
  %676 = vmatpush1.msra.mxu0 %v675
  %677 = vmatprep.subr.mxu0 0.0
  %v678 = vand.u32 %v106, 4294901760
  %679 = vmatpush1.msra.mxu0 %v678
  %680 = vmatprep.subr.mxu0 0.0
  %v681 = vand.u32 %v105, 4294901760
  %682 = vmatpush1.msra.mxu0 %v681
  %683 = vmatprep.subr.mxu0 0.0
  %v684 = vand.u32 %v136, 4294901760
  %685 = vmatpush2.msra.mxu0 %v684
  %686 = vmatprep.subr.mxu0 0.0
  %v687 = vand.u32 %v135, 4294901760
  %688 = vmatpush2.msra.mxu0 %v687
  %689 = vmatprep.subr.mxu0 0.0
  %v690 = vand.u32 %v134, 4294901760
  %691 = vmatpush2.msra.mxu0 %v690
  %692 = vmatprep.subr.mxu0 0.0
  %v693 = vand.u32 %v133, 4294901760
  %694 = vmatpush2.msra.mxu0 %v693
  %695 = vmatprep.subr.mxu0 0.0
  %v696 = vand.u32 %v132, 4294901760
  %697 = vmatpush2.msra.mxu0 %v696
  %698 = vmatprep.subr.mxu0 0.0
  %v699 = vand.u32 %v131, 4294901760
  %700 = vmatpush2.msra.mxu0 %v699
  %701 = vmatprep.subr.mxu0 0.0
  %v702 = vand.u32 %v130, 4294901760
  %703 = vmatpush2.msra.mxu0 %v702
  %704 = vmatprep.subr.mxu0 0.0
  %v705 = vand.u32 %v129, 4294901760
  %706 = vmatpush2.msra.mxu0 %v705
  %707 = vmatprep.subr.mxu0 0.0
  %v708 = vand.u32 %v128, 4294901760
  %709 = vmatpush2.msra.mxu0 %v708
  %710 = vmatprep.subr.mxu0 0.0
  %v711 = vand.u32 %v127, 4294901760
  %712 = vmatpush2.msra.mxu0 %v711
  %713 = vmatprep.subr.mxu0 0.0
  %v714 = vand.u32 %v126, 4294901760
  %715 = vmatpush2.msra.mxu0 %v714
  %716 = vmatprep.subr.mxu0 0.0
  %v717 = vand.u32 %v125, 4294901760
  %718 = vmatpush2.msra.mxu0 %v717
  %719 = vmatprep.subr.mxu0 0.0
  %v720 = vand.u32 %v124, 4294901760
  %721 = vmatpush2.msra.mxu0 %v720
  %722 = vmatprep.subr.mxu0 0.0
  %v723 = vand.u32 %v123, 4294901760
  %724 = vmatpush2.msra.mxu0 %v723
  %725 = vmatprep.subr.mxu0 0.0
  %v726 = vand.u32 %v122, 4294901760
  %727 = vmatpush2.msra.mxu0 %v726
  %728 = vmatprep.subr.mxu0 0.0
  %v729 = vand.u32 %v121, 4294901760
  %730 = vmatpush2.msra.mxu0 %v729
  %v731 = vand.u32 %v102, 4294901760
  %v732 = vsub.f32 %v102, %v731
  %v733 = vand.u32 %v732, 4294901760
  %734 = vmatprep.mubr.f32.mxu0 %v733
  %v735 = vand.u32 %v101, 4294901760
  %v736 = vsub.f32 %v101, %v735
  %v737 = vand.u32 %v736, 4294901760
  %738 = vmatmul.mubr.f32.gmra.mxu0 %v737
  %v739 = vpop.f32.mrf.mxu0
  %v740 = vadd.f32 %v632, %v739
  %v741 = vpop.f32.mrf.mxu0
  %742 = vdwg.mxu0
  %743 = vmatprep.subr.mxu0 0.0
  %v744 = vand.u32 %v120, 4294901760
  %v745 = vsub.f32 %v120, %v744
  %v746 = vand.u32 %v745, 4294901760
  %747 = vmatpush1.msra.mxu0 %v746
  %748 = vmatprep.subr.mxu0 0.0
  %v749 = vand.u32 %v119, 4294901760
  %v750 = vsub.f32 %v119, %v749
  %v751 = vand.u32 %v750, 4294901760
  %752 = vmatpush1.msra.mxu0 %v751
  %753 = vmatprep.subr.mxu0 0.0
  %v754 = vand.u32 %v118, 4294901760
  %v755 = vsub.f32 %v118, %v754
  %v756 = vand.u32 %v755, 4294901760
  %757 = vmatpush1.msra.mxu0 %v756
  %758 = vmatprep.subr.mxu0 0.0
  %v759 = vand.u32 %v117, 4294901760
  %v760 = vsub.f32 %v117, %v759
  %v761 = vand.u32 %v760, 4294901760
  %762 = vmatpush1.msra.mxu0 %v761
  %763 = vmatprep.subr.mxu0 0.0
  %v764 = vand.u32 %v116, 4294901760
  %v765 = vsub.f32 %v116, %v764
  %v766 = vand.u32 %v765, 4294901760
  %767 = vmatpush1.msra.mxu0 %v766
  %768 = vmatprep.subr.mxu0 0.0
  %v769 = vand.u32 %v115, 4294901760
  %v770 = vsub.f32 %v115, %v769
  %v771 = vand.u32 %v770, 4294901760
  %772 = vmatpush1.msra.mxu0 %v771
  %773 = vmatprep.subr.mxu0 0.0
  %v774 = vand.u32 %v114, 4294901760
  %v775 = vsub.f32 %v114, %v774
  %v776 = vand.u32 %v775, 4294901760
  %777 = vmatpush1.msra.mxu0 %v776
  %778 = vmatprep.subr.mxu0 0.0
  %v779 = vand.u32 %v113, 4294901760
  %v780 = vsub.f32 %v113, %v779
  %v781 = vand.u32 %v780, 4294901760
  %782 = vmatpush1.msra.mxu0 %v781
  %783 = vmatprep.subr.mxu0 0.0
  %v784 = vand.u32 %v112, 4294901760
  %v785 = vsub.f32 %v112, %v784
  %v786 = vand.u32 %v785, 4294901760
  %787 = vmatpush1.msra.mxu0 %v786
  %788 = vmatprep.subr.mxu0 0.0
  %v789 = vand.u32 %v111, 4294901760
  %v790 = vsub.f32 %v111, %v789
  %v791 = vand.u32 %v790, 4294901760
  %792 = vmatpush1.msra.mxu0 %v791
  %793 = vmatprep.subr.mxu0 0.0
  %v794 = vand.u32 %v110, 4294901760
  %v795 = vsub.f32 %v110, %v794
  %v796 = vand.u32 %v795, 4294901760
  %797 = vmatpush1.msra.mxu0 %v796
  %798 = vmatprep.subr.mxu0 0.0
  %v799 = vand.u32 %v109, 4294901760
  %v800 = vsub.f32 %v109, %v799
  %v801 = vand.u32 %v800, 4294901760
  %802 = vmatpush1.msra.mxu0 %v801
  %803 = vmatprep.subr.mxu0 0.0
  %v804 = vand.u32 %v108, 4294901760
  %v805 = vsub.f32 %v108, %v804
  %v806 = vand.u32 %v805, 4294901760
  %807 = vmatpush1.msra.mxu0 %v806
  %808 = vmatprep.subr.mxu0 0.0
  %v809 = vand.u32 %v107, 4294901760
  %v810 = vsub.f32 %v107, %v809
  %v811 = vand.u32 %v810, 4294901760
  %812 = vmatpush1.msra.mxu0 %v811
  %813 = vmatprep.subr.mxu0 0.0
  %v814 = vand.u32 %v106, 4294901760
  %v815 = vsub.f32 %v106, %v814
  %v816 = vand.u32 %v815, 4294901760
  %817 = vmatpush1.msra.mxu0 %v816
  %818 = vmatprep.subr.mxu0 0.0
  %v819 = vand.u32 %v105, 4294901760
  %v820 = vsub.f32 %v105, %v819
  %v821 = vand.u32 %v820, 4294901760
  %822 = vmatpush1.msra.mxu0 %v821
  %823 = vmatprep.subr.mxu0 0.0
  %v824 = vand.u32 %v136, 4294901760
  %v825 = vsub.f32 %v136, %v824
  %v826 = vand.u32 %v825, 4294901760
  %827 = vmatpush2.msra.mxu0 %v826
  %828 = vmatprep.subr.mxu0 0.0
  %v829 = vand.u32 %v135, 4294901760
  %v830 = vsub.f32 %v135, %v829
  %v831 = vand.u32 %v830, 4294901760
  %832 = vmatpush2.msra.mxu0 %v831
  %833 = vmatprep.subr.mxu0 0.0
  %v834 = vand.u32 %v134, 4294901760
  %v835 = vsub.f32 %v134, %v834
  %v836 = vand.u32 %v835, 4294901760
  %837 = vmatpush2.msra.mxu0 %v836
  %838 = vmatprep.subr.mxu0 0.0
  %v839 = vand.u32 %v133, 4294901760
  %v840 = vsub.f32 %v133, %v839
  %v841 = vand.u32 %v840, 4294901760
  %842 = vmatpush2.msra.mxu0 %v841
  %843 = vmatprep.subr.mxu0 0.0
  %v844 = vand.u32 %v132, 4294901760
  %v845 = vsub.f32 %v132, %v844
  %v846 = vand.u32 %v845, 4294901760
  %847 = vmatpush2.msra.mxu0 %v846
  %848 = vmatprep.subr.mxu0 0.0
  %v849 = vand.u32 %v131, 4294901760
  %v850 = vsub.f32 %v131, %v849
  %v851 = vand.u32 %v850, 4294901760
  %852 = vmatpush2.msra.mxu0 %v851
  %853 = vmatprep.subr.mxu0 0.0
  %v854 = vand.u32 %v130, 4294901760
  %v855 = vsub.f32 %v130, %v854
  %v856 = vand.u32 %v855, 4294901760
  %857 = vmatpush2.msra.mxu0 %v856
  %858 = vmatprep.subr.mxu0 0.0
  %v859 = vand.u32 %v129, 4294901760
  %v860 = vsub.f32 %v129, %v859
  %v861 = vand.u32 %v860, 4294901760
  %862 = vmatpush2.msra.mxu0 %v861
  %863 = vmatprep.subr.mxu0 0.0
  %v864 = vand.u32 %v128, 4294901760
  %v865 = vsub.f32 %v128, %v864
  %v866 = vand.u32 %v865, 4294901760
  %867 = vmatpush2.msra.mxu0 %v866
  %868 = vmatprep.subr.mxu0 0.0
  %v869 = vand.u32 %v127, 4294901760
  %v870 = vsub.f32 %v127, %v869
  %v871 = vand.u32 %v870, 4294901760
  %872 = vmatpush2.msra.mxu0 %v871
  %873 = vmatprep.subr.mxu0 0.0
  %v874 = vand.u32 %v126, 4294901760
  %v875 = vsub.f32 %v126, %v874
  %v876 = vand.u32 %v875, 4294901760
  %877 = vmatpush2.msra.mxu0 %v876
  %878 = vmatprep.subr.mxu0 0.0
  %v879 = vand.u32 %v125, 4294901760
  %v880 = vsub.f32 %v125, %v879
  %v881 = vand.u32 %v880, 4294901760
  %882 = vmatpush2.msra.mxu0 %v881
  %883 = vmatprep.subr.mxu0 0.0
  %v884 = vand.u32 %v124, 4294901760
  %v885 = vsub.f32 %v124, %v884
  %v886 = vand.u32 %v885, 4294901760
  %887 = vmatpush2.msra.mxu0 %v886
  %888 = vmatprep.subr.mxu0 0.0
  %v889 = vand.u32 %v123, 4294901760
  %v890 = vsub.f32 %v123, %v889
  %v891 = vand.u32 %v890, 4294901760
  %892 = vmatpush2.msra.mxu0 %v891
  %893 = vmatprep.subr.mxu0 0.0
  %v894 = vand.u32 %v122, 4294901760
  %v895 = vsub.f32 %v122, %v894
  %v896 = vand.u32 %v895, 4294901760
  %897 = vmatpush2.msra.mxu0 %v896
  %898 = vmatprep.subr.mxu0 0.0
  %v899 = vand.u32 %v121, 4294901760
  %v900 = vsub.f32 %v121, %v899
  %v901 = vand.u32 %v900, 4294901760
  %902 = vmatpush2.msra.mxu0 %v901
  %v903 = vand.u32 %v102, 4294901760
  %904 = vmatprep.mubr.f32.mxu0 %v903
  %v905 = vand.u32 %v101, 4294901760
  %906 = vmatmul.mubr.f32.gmra.mxu0 %v905
  %v907 = vpop.f32.mrf.mxu0
  %v908 = vadd.f32 %v740, %v907
  %v909 = vpop.f32.mrf.mxu0
  %910 = vdwg.mxu0
  %911 = vmatprep.subr.mxu0 0.0
  %v912 = vand.u32 %v120, 4294901760
  %913 = vmatpush1.msra.mxu0 %v912
  %914 = vmatprep.subr.mxu0 0.0
  %v915 = vand.u32 %v119, 4294901760
  %916 = vmatpush1.msra.mxu0 %v915
  %917 = vmatprep.subr.mxu0 0.0
  %v918 = vand.u32 %v118, 4294901760
  %919 = vmatpush1.msra.mxu0 %v918
  %920 = vmatprep.subr.mxu0 0.0
  %v921 = vand.u32 %v117, 4294901760
  %922 = vmatpush1.msra.mxu0 %v921
  %923 = vmatprep.subr.mxu0 0.0
  %v924 = vand.u32 %v116, 4294901760
  %925 = vmatpush1.msra.mxu0 %v924
  %926 = vmatprep.subr.mxu0 0.0
  %v927 = vand.u32 %v115, 4294901760
  %928 = vmatpush1.msra.mxu0 %v927
  %929 = vmatprep.subr.mxu0 0.0
  %v930 = vand.u32 %v114, 4294901760
  %931 = vmatpush1.msra.mxu0 %v930
  %932 = vmatprep.subr.mxu0 0.0
  %v933 = vand.u32 %v113, 4294901760
  %934 = vmatpush1.msra.mxu0 %v933
  %935 = vmatprep.subr.mxu0 0.0
  %v936 = vand.u32 %v112, 4294901760
  %937 = vmatpush1.msra.mxu0 %v936
  %938 = vmatprep.subr.mxu0 0.0
  %v939 = vand.u32 %v111, 4294901760
  %940 = vmatpush1.msra.mxu0 %v939
  %941 = vmatprep.subr.mxu0 0.0
  %v942 = vand.u32 %v110, 4294901760
  %943 = vmatpush1.msra.mxu0 %v942
  %944 = vmatprep.subr.mxu0 0.0
  %v945 = vand.u32 %v109, 4294901760
  %946 = vmatpush1.msra.mxu0 %v945
  %947 = vmatprep.subr.mxu0 0.0
  %v948 = vand.u32 %v108, 4294901760
  %949 = vmatpush1.msra.mxu0 %v948
  %950 = vmatprep.subr.mxu0 0.0
  %v951 = vand.u32 %v107, 4294901760
  %952 = vmatpush1.msra.mxu0 %v951
  %953 = vmatprep.subr.mxu0 0.0
  %v954 = vand.u32 %v106, 4294901760
  %955 = vmatpush1.msra.mxu0 %v954
  %956 = vmatprep.subr.mxu0 0.0
  %v957 = vand.u32 %v105, 4294901760
  %958 = vmatpush1.msra.mxu0 %v957
  %959 = vmatprep.subr.mxu0 0.0
  %v960 = vand.u32 %v136, 4294901760
  %961 = vmatpush2.msra.mxu0 %v960
  %962 = vmatprep.subr.mxu0 0.0
  %v963 = vand.u32 %v135, 4294901760
  %964 = vmatpush2.msra.mxu0 %v963
  %965 = vmatprep.subr.mxu0 0.0
  %v966 = vand.u32 %v134, 4294901760
  %967 = vmatpush2.msra.mxu0 %v966
  %968 = vmatprep.subr.mxu0 0.0
  %v969 = vand.u32 %v133, 4294901760
  %970 = vmatpush2.msra.mxu0 %v969
  %971 = vmatprep.subr.mxu0 0.0
  %v972 = vand.u32 %v132, 4294901760
  %973 = vmatpush2.msra.mxu0 %v972
  %974 = vmatprep.subr.mxu0 0.0
  %v975 = vand.u32 %v131, 4294901760
  %976 = vmatpush2.msra.mxu0 %v975
  %977 = vmatprep.subr.mxu0 0.0
  %v978 = vand.u32 %v130, 4294901760
  %979 = vmatpush2.msra.mxu0 %v978
  %980 = vmatprep.subr.mxu0 0.0
  %v981 = vand.u32 %v129, 4294901760
  %982 = vmatpush2.msra.mxu0 %v981
  %983 = vmatprep.subr.mxu0 0.0
  %v984 = vand.u32 %v128, 4294901760
  %985 = vmatpush2.msra.mxu0 %v984
  %986 = vmatprep.subr.mxu0 0.0
  %v987 = vand.u32 %v127, 4294901760
  %988 = vmatpush2.msra.mxu0 %v987
  %989 = vmatprep.subr.mxu0 0.0
  %v990 = vand.u32 %v126, 4294901760
  %991 = vmatpush2.msra.mxu0 %v990
  %992 = vmatprep.subr.mxu0 0.0
  %v993 = vand.u32 %v125, 4294901760
  %994 = vmatpush2.msra.mxu0 %v993
  %995 = vmatprep.subr.mxu0 0.0
  %v996 = vand.u32 %v124, 4294901760
  %997 = vmatpush2.msra.mxu0 %v996
  %998 = vmatprep.subr.mxu0 0.0
  %v999 = vand.u32 %v123, 4294901760
  %1000 = vmatpush2.msra.mxu0 %v999
  %1001 = vmatprep.subr.mxu0 0.0
  %v1002 = vand.u32 %v122, 4294901760
  %1003 = vmatpush2.msra.mxu0 %v1002
  %1004 = vmatprep.subr.mxu0 0.0
  %v1005 = vand.u32 %v121, 4294901760
  %1006 = vmatpush2.msra.mxu0 %v1005
  %v1007 = vand.u32 %v102, 4294901760
  %1008 = vmatprep.mubr.f32.mxu0 %v1007
  %v1009 = vand.u32 %v101, 4294901760
  %1010 = vmatmul.mubr.f32.gmra.mxu0 %v1009
  %v1011 = vpop.f32.mrf.mxu0
  %v1012 = vadd.f32 %v908, %v1011
  %v1013 = vpop.f32.mrf.mxu0
  %1014 = vdwg.mxu0
  %1015 = vmatprep.subr.mxu0 0.0
  %v1016 = vand.u32 %v152, 4294901760
  %1017 = vmatpush1.msra.mxu0 %v1016
  %1018 = vmatprep.subr.mxu0 0.0
  %v1019 = vand.u32 %v151, 4294901760
  %1020 = vmatpush1.msra.mxu0 %v1019
  %1021 = vmatprep.subr.mxu0 0.0
  %v1022 = vand.u32 %v150, 4294901760
  %1023 = vmatpush1.msra.mxu0 %v1022
  %1024 = vmatprep.subr.mxu0 0.0
  %v1025 = vand.u32 %v149, 4294901760
  %1026 = vmatpush1.msra.mxu0 %v1025
  %1027 = vmatprep.subr.mxu0 0.0
  %v1028 = vand.u32 %v148, 4294901760
  %1029 = vmatpush1.msra.mxu0 %v1028
  %1030 = vmatprep.subr.mxu0 0.0
  %v1031 = vand.u32 %v147, 4294901760
  %1032 = vmatpush1.msra.mxu0 %v1031
  %1033 = vmatprep.subr.mxu0 0.0
  %v1034 = vand.u32 %v146, 4294901760
  %1035 = vmatpush1.msra.mxu0 %v1034
  %1036 = vmatprep.subr.mxu0 0.0
  %v1037 = vand.u32 %v145, 4294901760
  %1038 = vmatpush1.msra.mxu0 %v1037
  %1039 = vmatprep.subr.mxu0 0.0
  %v1040 = vand.u32 %v144, 4294901760
  %1041 = vmatpush1.msra.mxu0 %v1040
  %1042 = vmatprep.subr.mxu0 0.0
  %v1043 = vand.u32 %v143, 4294901760
  %1044 = vmatpush1.msra.mxu0 %v1043
  %1045 = vmatprep.subr.mxu0 0.0
  %v1046 = vand.u32 %v142, 4294901760
  %1047 = vmatpush1.msra.mxu0 %v1046
  %1048 = vmatprep.subr.mxu0 0.0
  %v1049 = vand.u32 %v141, 4294901760
  %1050 = vmatpush1.msra.mxu0 %v1049
  %1051 = vmatprep.subr.mxu0 0.0
  %v1052 = vand.u32 %v140, 4294901760
  %1053 = vmatpush1.msra.mxu0 %v1052
  %1054 = vmatprep.subr.mxu0 0.0
  %v1055 = vand.u32 %v139, 4294901760
  %1056 = vmatpush1.msra.mxu0 %v1055
  %1057 = vmatprep.subr.mxu0 0.0
  %v1058 = vand.u32 %v138, 4294901760
  %1059 = vmatpush1.msra.mxu0 %v1058
  %1060 = vmatprep.subr.mxu0 0.0
  %v1061 = vand.u32 %v137, 4294901760
  %1062 = vmatpush1.msra.mxu0 %v1061
  %1063 = vmatprep.subr.mxu0 0.0
  %1064 = vmatpush2.msra.mxu0 0.0
  %1065 = vmatprep.subr.mxu0 0.0
  %1066 = vmatpush2.msra.mxu0 0.0
  %1067 = vmatprep.subr.mxu0 0.0
  %1068 = vmatpush2.msra.mxu0 0.0
  %1069 = vmatprep.subr.mxu0 0.0
  %1070 = vmatpush2.msra.mxu0 0.0
  %1071 = vmatprep.subr.mxu0 0.0
  %1072 = vmatpush2.msra.mxu0 0.0
  %1073 = vmatprep.subr.mxu0 0.0
  %1074 = vmatpush2.msra.mxu0 0.0
  %1075 = vmatprep.subr.mxu0 0.0
  %1076 = vmatpush2.msra.mxu0 0.0
  %1077 = vmatprep.subr.mxu0 0.0
  %1078 = vmatpush2.msra.mxu0 0.0
  %1079 = vmatprep.subr.mxu0 0.0
  %1080 = vmatpush2.msra.mxu0 0.0
  %1081 = vmatprep.subr.mxu0 0.0
  %1082 = vmatpush2.msra.mxu0 0.0
  %1083 = vmatprep.subr.mxu0 0.0
  %1084 = vmatpush2.msra.mxu0 0.0
  %1085 = vmatprep.subr.mxu0 0.0
  %1086 = vmatpush2.msra.mxu0 0.0
  %1087 = vmatprep.subr.mxu0 0.0
  %1088 = vmatpush2.msra.mxu0 0.0
  %1089 = vmatprep.subr.mxu0 0.0
  %1090 = vmatpush2.msra.mxu0 0.0
  %1091 = vmatprep.subr.mxu0 0.0
  %1092 = vmatpush2.msra.mxu0 0.0
  %1093 = vmatprep.subr.mxu0 0.0
  %1094 = vmatpush2.msra.mxu0 0.0
  %1095 = vmatprep.mubr.f32.mxu0 0.0
  %v1096 = vand.u32 %v103, 4294901760
  %v1097 = vsub.f32 %v103, %v1096
  %v1098 = vand.u32 %v1097, 4294901760
  %v1099 = vsub.f32 %v1097, %v1098
  %v1100 = vand.u32 %v1099, 4294901760
  %1101 = vmatmul.mubr.f32.gmra.mxu0 %v1100
  %v1102 = vpop.f32.mrf.mxu0
  %v1103 = vadd.f32 %v1012, %v1102
  %v1104 = vpop.f32.mrf.mxu0
  %1105 = vdwg.mxu0
  %1106 = vmatprep.subr.mxu0 0.0
  %v1107 = vand.u32 %v152, 4294901760
  %v1108 = vsub.f32 %v152, %v1107
  %v1109 = vand.u32 %v1108, 4294901760
  %v1110 = vsub.f32 %v1108, %v1109
  %v1111 = vand.u32 %v1110, 4294901760
  %1112 = vmatpush1.msra.mxu0 %v1111
  %1113 = vmatprep.subr.mxu0 0.0
  %v1114 = vand.u32 %v151, 4294901760
  %v1115 = vsub.f32 %v151, %v1114
  %v1116 = vand.u32 %v1115, 4294901760
  %v1117 = vsub.f32 %v1115, %v1116
  %v1118 = vand.u32 %v1117, 4294901760
  %1119 = vmatpush1.msra.mxu0 %v1118
  %1120 = vmatprep.subr.mxu0 0.0
  %v1121 = vand.u32 %v150, 4294901760
  %v1122 = vsub.f32 %v150, %v1121
  %v1123 = vand.u32 %v1122, 4294901760
  %v1124 = vsub.f32 %v1122, %v1123
  %v1125 = vand.u32 %v1124, 4294901760
  %1126 = vmatpush1.msra.mxu0 %v1125
  %1127 = vmatprep.subr.mxu0 0.0
  %v1128 = vand.u32 %v149, 4294901760
  %v1129 = vsub.f32 %v149, %v1128
  %v1130 = vand.u32 %v1129, 4294901760
  %v1131 = vsub.f32 %v1129, %v1130
  %v1132 = vand.u32 %v1131, 4294901760
  %1133 = vmatpush1.msra.mxu0 %v1132
  %1134 = vmatprep.subr.mxu0 0.0
  %v1135 = vand.u32 %v148, 4294901760
  %v1136 = vsub.f32 %v148, %v1135
  %v1137 = vand.u32 %v1136, 4294901760
  %v1138 = vsub.f32 %v1136, %v1137
  %v1139 = vand.u32 %v1138, 4294901760
  %1140 = vmatpush1.msra.mxu0 %v1139
  %1141 = vmatprep.subr.mxu0 0.0
  %v1142 = vand.u32 %v147, 4294901760
  %v1143 = vsub.f32 %v147, %v1142
  %v1144 = vand.u32 %v1143, 4294901760
  %v1145 = vsub.f32 %v1143, %v1144
  %v1146 = vand.u32 %v1145, 4294901760
  %1147 = vmatpush1.msra.mxu0 %v1146
  %1148 = vmatprep.subr.mxu0 0.0
  %v1149 = vand.u32 %v146, 4294901760
  %v1150 = vsub.f32 %v146, %v1149
  %v1151 = vand.u32 %v1150, 4294901760
  %v1152 = vsub.f32 %v1150, %v1151
  %v1153 = vand.u32 %v1152, 4294901760
  %1154 = vmatpush1.msra.mxu0 %v1153
  %1155 = vmatprep.subr.mxu0 0.0
  %v1156 = vand.u32 %v145, 4294901760
  %v1157 = vsub.f32 %v145, %v1156
  %v1158 = vand.u32 %v1157, 4294901760
  %v1159 = vsub.f32 %v1157, %v1158
  %v1160 = vand.u32 %v1159, 4294901760
  %1161 = vmatpush1.msra.mxu0 %v1160
  %1162 = vmatprep.subr.mxu0 0.0
  %v1163 = vand.u32 %v144, 4294901760
  %v1164 = vsub.f32 %v144, %v1163
  %v1165 = vand.u32 %v1164, 4294901760
  %v1166 = vsub.f32 %v1164, %v1165
  %v1167 = vand.u32 %v1166, 4294901760
  %1168 = vmatpush1.msra.mxu0 %v1167
  %1169 = vmatprep.subr.mxu0 0.0
  %v1170 = vand.u32 %v143, 4294901760
  %v1171 = vsub.f32 %v143, %v1170
  %v1172 = vand.u32 %v1171, 4294901760
  %v1173 = vsub.f32 %v1171, %v1172
  %v1174 = vand.u32 %v1173, 4294901760
  %1175 = vmatpush1.msra.mxu0 %v1174
  %1176 = vmatprep.subr.mxu0 0.0
  %v1177 = vand.u32 %v142, 4294901760
  %v1178 = vsub.f32 %v142, %v1177
  %v1179 = vand.u32 %v1178, 4294901760
  %v1180 = vsub.f32 %v1178, %v1179
  %v1181 = vand.u32 %v1180, 4294901760
  %1182 = vmatpush1.msra.mxu0 %v1181
  %1183 = vmatprep.subr.mxu0 0.0
  %v1184 = vand.u32 %v141, 4294901760
  %v1185 = vsub.f32 %v141, %v1184
  %v1186 = vand.u32 %v1185, 4294901760
  %v1187 = vsub.f32 %v1185, %v1186
  %v1188 = vand.u32 %v1187, 4294901760
  %1189 = vmatpush1.msra.mxu0 %v1188
  %1190 = vmatprep.subr.mxu0 0.0
  %v1191 = vand.u32 %v140, 4294901760
  %v1192 = vsub.f32 %v140, %v1191
  %v1193 = vand.u32 %v1192, 4294901760
  %v1194 = vsub.f32 %v1192, %v1193
  %v1195 = vand.u32 %v1194, 4294901760
  %1196 = vmatpush1.msra.mxu0 %v1195
  %1197 = vmatprep.subr.mxu0 0.0
  %v1198 = vand.u32 %v139, 4294901760
  %v1199 = vsub.f32 %v139, %v1198
  %v1200 = vand.u32 %v1199, 4294901760
  %v1201 = vsub.f32 %v1199, %v1200
  %v1202 = vand.u32 %v1201, 4294901760
  %1203 = vmatpush1.msra.mxu0 %v1202
  %1204 = vmatprep.subr.mxu0 0.0
  %v1205 = vand.u32 %v138, 4294901760
  %v1206 = vsub.f32 %v138, %v1205
  %v1207 = vand.u32 %v1206, 4294901760
  %v1208 = vsub.f32 %v1206, %v1207
  %v1209 = vand.u32 %v1208, 4294901760
  %1210 = vmatpush1.msra.mxu0 %v1209
  %1211 = vmatprep.subr.mxu0 0.0
  %v1212 = vand.u32 %v137, 4294901760
  %v1213 = vsub.f32 %v137, %v1212
  %v1214 = vand.u32 %v1213, 4294901760
  %v1215 = vsub.f32 %v1213, %v1214
  %v1216 = vand.u32 %v1215, 4294901760
  %1217 = vmatpush1.msra.mxu0 %v1216
  %1218 = vmatprep.subr.mxu0 0.0
  %1219 = vmatpush2.msra.mxu0 0.0
  %1220 = vmatprep.subr.mxu0 0.0
  %1221 = vmatpush2.msra.mxu0 0.0
  %1222 = vmatprep.subr.mxu0 0.0
  %1223 = vmatpush2.msra.mxu0 0.0
  %1224 = vmatprep.subr.mxu0 0.0
  %1225 = vmatpush2.msra.mxu0 0.0
  %1226 = vmatprep.subr.mxu0 0.0
  %1227 = vmatpush2.msra.mxu0 0.0
  %1228 = vmatprep.subr.mxu0 0.0
  %1229 = vmatpush2.msra.mxu0 0.0
  %1230 = vmatprep.subr.mxu0 0.0
  %1231 = vmatpush2.msra.mxu0 0.0
  %1232 = vmatprep.subr.mxu0 0.0
  %1233 = vmatpush2.msra.mxu0 0.0
  %1234 = vmatprep.subr.mxu0 0.0
  %1235 = vmatpush2.msra.mxu0 0.0
  %1236 = vmatprep.subr.mxu0 0.0
  %1237 = vmatpush2.msra.mxu0 0.0
  %1238 = vmatprep.subr.mxu0 0.0
  %1239 = vmatpush2.msra.mxu0 0.0
  %1240 = vmatprep.subr.mxu0 0.0
  %1241 = vmatpush2.msra.mxu0 0.0
  %1242 = vmatprep.subr.mxu0 0.0
  %1243 = vmatpush2.msra.mxu0 0.0
  %1244 = vmatprep.subr.mxu0 0.0
  %1245 = vmatpush2.msra.mxu0 0.0
  %1246 = vmatprep.subr.mxu0 0.0
  %1247 = vmatpush2.msra.mxu0 0.0
  %1248 = vmatprep.subr.mxu0 0.0
  %1249 = vmatpush2.msra.mxu0 0.0
  %1250 = vmatprep.mubr.f32.mxu0 0.0
  %v1251 = vand.u32 %v103, 4294901760
  %1252 = vmatmul.mubr.f32.gmra.mxu0 %v1251
  %v1253 = vpop.f32.mrf.mxu0
  %v1254 = vadd.f32 %v1103, %v1253
  %v1255 = vpop.f32.mrf.mxu0
  %1256 = vdwg.mxu0
  %1257 = vmatprep.subr.mxu0 0.0
  %v1258 = vand.u32 %v152, 4294901760
  %v1259 = vsub.f32 %v152, %v1258
  %1260 = vmatpush1.msra.mxu0 %v1259
  %1261 = vmatprep.subr.mxu0 0.0
  %v1262 = vand.u32 %v151, 4294901760
  %v1263 = vsub.f32 %v151, %v1262
  %1264 = vmatpush1.msra.mxu0 %v1263
  %1265 = vmatprep.subr.mxu0 0.0
  %v1266 = vand.u32 %v150, 4294901760
  %v1267 = vsub.f32 %v150, %v1266
  %1268 = vmatpush1.msra.mxu0 %v1267
  %1269 = vmatprep.subr.mxu0 0.0
  %v1270 = vand.u32 %v149, 4294901760
  %v1271 = vsub.f32 %v149, %v1270
  %1272 = vmatpush1.msra.mxu0 %v1271
  %1273 = vmatprep.subr.mxu0 0.0
  %v1274 = vand.u32 %v148, 4294901760
  %v1275 = vsub.f32 %v148, %v1274
  %1276 = vmatpush1.msra.mxu0 %v1275
  %1277 = vmatprep.subr.mxu0 0.0
  %v1278 = vand.u32 %v147, 4294901760
  %v1279 = vsub.f32 %v147, %v1278
  %1280 = vmatpush1.msra.mxu0 %v1279
  %1281 = vmatprep.subr.mxu0 0.0
  %v1282 = vand.u32 %v146, 4294901760
  %v1283 = vsub.f32 %v146, %v1282
  %1284 = vmatpush1.msra.mxu0 %v1283
  %1285 = vmatprep.subr.mxu0 0.0
  %v1286 = vand.u32 %v145, 4294901760
  %v1287 = vsub.f32 %v145, %v1286
  %1288 = vmatpush1.msra.mxu0 %v1287
  %1289 = vmatprep.subr.mxu0 0.0
  %v1290 = vand.u32 %v144, 4294901760
  %v1291 = vsub.f32 %v144, %v1290
  %1292 = vmatpush1.msra.mxu0 %v1291
  %1293 = vmatprep.subr.mxu0 0.0
  %v1294 = vand.u32 %v143, 4294901760
  %v1295 = vsub.f32 %v143, %v1294
  %1296 = vmatpush1.msra.mxu0 %v1295
  %1297 = vmatprep.subr.mxu0 0.0
  %v1298 = vand.u32 %v142, 4294901760
  %v1299 = vsub.f32 %v142, %v1298
  %1300 = vmatpush1.msra.mxu0 %v1299
  %1301 = vmatprep.subr.mxu0 0.0
  %v1302 = vand.u32 %v141, 4294901760
  %v1303 = vsub.f32 %v141, %v1302
  %1304 = vmatpush1.msra.mxu0 %v1303
  %1305 = vmatprep.subr.mxu0 0.0
  %v1306 = vand.u32 %v140, 4294901760
  %v1307 = vsub.f32 %v140, %v1306
  %1308 = vmatpush1.msra.mxu0 %v1307
  %1309 = vmatprep.subr.mxu0 0.0
  %v1310 = vand.u32 %v139, 4294901760
  %v1311 = vsub.f32 %v139, %v1310
  %1312 = vmatpush1.msra.mxu0 %v1311
  %1313 = vmatprep.subr.mxu0 0.0
  %v1314 = vand.u32 %v138, 4294901760
  %v1315 = vsub.f32 %v138, %v1314
  %1316 = vmatpush1.msra.mxu0 %v1315
  %1317 = vmatprep.subr.mxu0 0.0
  %v1318 = vand.u32 %v137, 4294901760
  %v1319 = vsub.f32 %v137, %v1318
  %1320 = vmatpush1.msra.mxu0 %v1319
  %1321 = vmatprep.subr.mxu0 0.0
  %1322 = vmatpush2.msra.mxu0 0.0
  %1323 = vmatprep.subr.mxu0 0.0
  %1324 = vmatpush2.msra.mxu0 0.0
  %1325 = vmatprep.subr.mxu0 0.0
  %1326 = vmatpush2.msra.mxu0 0.0
  %1327 = vmatprep.subr.mxu0 0.0
  %1328 = vmatpush2.msra.mxu0 0.0
  %1329 = vmatprep.subr.mxu0 0.0
  %1330 = vmatpush2.msra.mxu0 0.0
  %1331 = vmatprep.subr.mxu0 0.0
  %1332 = vmatpush2.msra.mxu0 0.0
  %1333 = vmatprep.subr.mxu0 0.0
  %1334 = vmatpush2.msra.mxu0 0.0
  %1335 = vmatprep.subr.mxu0 0.0
  %1336 = vmatpush2.msra.mxu0 0.0
  %1337 = vmatprep.subr.mxu0 0.0
  %1338 = vmatpush2.msra.mxu0 0.0
  %1339 = vmatprep.subr.mxu0 0.0
  %1340 = vmatpush2.msra.mxu0 0.0
  %1341 = vmatprep.subr.mxu0 0.0
  %1342 = vmatpush2.msra.mxu0 0.0
  %1343 = vmatprep.subr.mxu0 0.0
  %1344 = vmatpush2.msra.mxu0 0.0
  %1345 = vmatprep.subr.mxu0 0.0
  %1346 = vmatpush2.msra.mxu0 0.0
  %1347 = vmatprep.subr.mxu0 0.0
  %1348 = vmatpush2.msra.mxu0 0.0
  %1349 = vmatprep.subr.mxu0 0.0
  %1350 = vmatpush2.msra.mxu0 0.0
  %1351 = vmatprep.subr.mxu0 0.0
  %1352 = vmatpush2.msra.mxu0 0.0
  %1353 = vmatprep.mubr.f32.mxu0 0.0
  %v1354 = vand.u32 %v103, 4294901760
  %v1355 = vsub.f32 %v103, %v1354
  %1356 = vmatmul.mubr.f32.gmra.mxu0 %v1355
  %v1357 = vpop.f32.mrf.mxu0
  %v1358 = vadd.f32 %v1254, %v1357
  %v1359 = vpop.f32.mrf.mxu0
  %1360 = vdwg.mxu0
  %1361 = vmatprep.subr.mxu0 0.0
  %v1362 = vand.u32 %v152, 4294901760
  %1363 = vmatpush1.msra.mxu0 %v1362
  %1364 = vmatprep.subr.mxu0 0.0
  %v1365 = vand.u32 %v151, 4294901760
  %1366 = vmatpush1.msra.mxu0 %v1365
  %1367 = vmatprep.subr.mxu0 0.0
  %v1368 = vand.u32 %v150, 4294901760
  %1369 = vmatpush1.msra.mxu0 %v1368
  %1370 = vmatprep.subr.mxu0 0.0
  %v1371 = vand.u32 %v149, 4294901760
  %1372 = vmatpush1.msra.mxu0 %v1371
  %1373 = vmatprep.subr.mxu0 0.0
  %v1374 = vand.u32 %v148, 4294901760
  %1375 = vmatpush1.msra.mxu0 %v1374
  %1376 = vmatprep.subr.mxu0 0.0
  %v1377 = vand.u32 %v147, 4294901760
  %1378 = vmatpush1.msra.mxu0 %v1377
  %1379 = vmatprep.subr.mxu0 0.0
  %v1380 = vand.u32 %v146, 4294901760
  %1381 = vmatpush1.msra.mxu0 %v1380
  %1382 = vmatprep.subr.mxu0 0.0
  %v1383 = vand.u32 %v145, 4294901760
  %1384 = vmatpush1.msra.mxu0 %v1383
  %1385 = vmatprep.subr.mxu0 0.0
  %v1386 = vand.u32 %v144, 4294901760
  %1387 = vmatpush1.msra.mxu0 %v1386
  %1388 = vmatprep.subr.mxu0 0.0
  %v1389 = vand.u32 %v143, 4294901760
  %1390 = vmatpush1.msra.mxu0 %v1389
  %1391 = vmatprep.subr.mxu0 0.0
  %v1392 = vand.u32 %v142, 4294901760
  %1393 = vmatpush1.msra.mxu0 %v1392
  %1394 = vmatprep.subr.mxu0 0.0
  %v1395 = vand.u32 %v141, 4294901760
  %1396 = vmatpush1.msra.mxu0 %v1395
  %1397 = vmatprep.subr.mxu0 0.0
  %v1398 = vand.u32 %v140, 4294901760
  %1399 = vmatpush1.msra.mxu0 %v1398
  %1400 = vmatprep.subr.mxu0 0.0
  %v1401 = vand.u32 %v139, 4294901760
  %1402 = vmatpush1.msra.mxu0 %v1401
  %1403 = vmatprep.subr.mxu0 0.0
  %v1404 = vand.u32 %v138, 4294901760
  %1405 = vmatpush1.msra.mxu0 %v1404
  %1406 = vmatprep.subr.mxu0 0.0
  %v1407 = vand.u32 %v137, 4294901760
  %1408 = vmatpush1.msra.mxu0 %v1407
  %1409 = vmatprep.subr.mxu0 0.0
  %1410 = vmatpush2.msra.mxu0 0.0
  %1411 = vmatprep.subr.mxu0 0.0
  %1412 = vmatpush2.msra.mxu0 0.0
  %1413 = vmatprep.subr.mxu0 0.0
  %1414 = vmatpush2.msra.mxu0 0.0
  %1415 = vmatprep.subr.mxu0 0.0
  %1416 = vmatpush2.msra.mxu0 0.0
  %1417 = vmatprep.subr.mxu0 0.0
  %1418 = vmatpush2.msra.mxu0 0.0
  %1419 = vmatprep.subr.mxu0 0.0
  %1420 = vmatpush2.msra.mxu0 0.0
  %1421 = vmatprep.subr.mxu0 0.0
  %1422 = vmatpush2.msra.mxu0 0.0
  %1423 = vmatprep.subr.mxu0 0.0
  %1424 = vmatpush2.msra.mxu0 0.0
  %1425 = vmatprep.subr.mxu0 0.0
  %1426 = vmatpush2.msra.mxu0 0.0
  %1427 = vmatprep.subr.mxu0 0.0
  %1428 = vmatpush2.msra.mxu0 0.0
  %1429 = vmatprep.subr.mxu0 0.0
  %1430 = vmatpush2.msra.mxu0 0.0
  %1431 = vmatprep.subr.mxu0 0.0
  %1432 = vmatpush2.msra.mxu0 0.0
  %1433 = vmatprep.subr.mxu0 0.0
  %1434 = vmatpush2.msra.mxu0 0.0
  %1435 = vmatprep.subr.mxu0 0.0
  %1436 = vmatpush2.msra.mxu0 0.0
  %1437 = vmatprep.subr.mxu0 0.0
  %1438 = vmatpush2.msra.mxu0 0.0
  %1439 = vmatprep.subr.mxu0 0.0
  %1440 = vmatpush2.msra.mxu0 0.0
  %1441 = vmatprep.mubr.f32.mxu0 0.0
  %v1442 = vand.u32 %v103, 4294901760
  %v1443 = vsub.f32 %v103, %v1442
  %v1444 = vand.u32 %v1443, 4294901760
  %1445 = vmatmul.mubr.f32.gmra.mxu0 %v1444
  %v1446 = vpop.f32.mrf.mxu0
  %v1447 = vadd.f32 %v1358, %v1446
  %v1448 = vpop.f32.mrf.mxu0
  %1449 = vdwg.mxu0
  %1450 = vmatprep.subr.mxu0 0.0
  %v1451 = vand.u32 %v152, 4294901760
  %v1452 = vsub.f32 %v152, %v1451
  %v1453 = vand.u32 %v1452, 4294901760
  %1454 = vmatpush1.msra.mxu0 %v1453
  %1455 = vmatprep.subr.mxu0 0.0
  %v1456 = vand.u32 %v151, 4294901760
  %v1457 = vsub.f32 %v151, %v1456
  %v1458 = vand.u32 %v1457, 4294901760
  %1459 = vmatpush1.msra.mxu0 %v1458
  %1460 = vmatprep.subr.mxu0 0.0
  %v1461 = vand.u32 %v150, 4294901760
  %v1462 = vsub.f32 %v150, %v1461
  %v1463 = vand.u32 %v1462, 4294901760
  %1464 = vmatpush1.msra.mxu0 %v1463
  %1465 = vmatprep.subr.mxu0 0.0
  %v1466 = vand.u32 %v149, 4294901760
  %v1467 = vsub.f32 %v149, %v1466
  %v1468 = vand.u32 %v1467, 4294901760
  %1469 = vmatpush1.msra.mxu0 %v1468
  %1470 = vmatprep.subr.mxu0 0.0
  %v1471 = vand.u32 %v148, 4294901760
  %v1472 = vsub.f32 %v148, %v1471
  %v1473 = vand.u32 %v1472, 4294901760
  %1474 = vmatpush1.msra.mxu0 %v1473
  %1475 = vmatprep.subr.mxu0 0.0
  %v1476 = vand.u32 %v147, 4294901760
  %v1477 = vsub.f32 %v147, %v1476
  %v1478 = vand.u32 %v1477, 4294901760
  %1479 = vmatpush1.msra.mxu0 %v1478
  %1480 = vmatprep.subr.mxu0 0.0
  %v1481 = vand.u32 %v146, 4294901760
  %v1482 = vsub.f32 %v146, %v1481
  %v1483 = vand.u32 %v1482, 4294901760
  %1484 = vmatpush1.msra.mxu0 %v1483
  %1485 = vmatprep.subr.mxu0 0.0
  %v1486 = vand.u32 %v145, 4294901760
  %v1487 = vsub.f32 %v145, %v1486
  %v1488 = vand.u32 %v1487, 4294901760
  %1489 = vmatpush1.msra.mxu0 %v1488
  %1490 = vmatprep.subr.mxu0 0.0
  %v1491 = vand.u32 %v144, 4294901760
  %v1492 = vsub.f32 %v144, %v1491
  %v1493 = vand.u32 %v1492, 4294901760
  %1494 = vmatpush1.msra.mxu0 %v1493
  %1495 = vmatprep.subr.mxu0 0.0
  %v1496 = vand.u32 %v143, 4294901760
  %v1497 = vsub.f32 %v143, %v1496
  %v1498 = vand.u32 %v1497, 4294901760
  %1499 = vmatpush1.msra.mxu0 %v1498
  %1500 = vmatprep.subr.mxu0 0.0
  %v1501 = vand.u32 %v142, 4294901760
  %v1502 = vsub.f32 %v142, %v1501
  %v1503 = vand.u32 %v1502, 4294901760
  %1504 = vmatpush1.msra.mxu0 %v1503
  %1505 = vmatprep.subr.mxu0 0.0
  %v1506 = vand.u32 %v141, 4294901760
  %v1507 = vsub.f32 %v141, %v1506
  %v1508 = vand.u32 %v1507, 4294901760
  %1509 = vmatpush1.msra.mxu0 %v1508
  %1510 = vmatprep.subr.mxu0 0.0
  %v1511 = vand.u32 %v140, 4294901760
  %v1512 = vsub.f32 %v140, %v1511
  %v1513 = vand.u32 %v1512, 4294901760
  %1514 = vmatpush1.msra.mxu0 %v1513
  %1515 = vmatprep.subr.mxu0 0.0
  %v1516 = vand.u32 %v139, 4294901760
  %v1517 = vsub.f32 %v139, %v1516
  %v1518 = vand.u32 %v1517, 4294901760
  %1519 = vmatpush1.msra.mxu0 %v1518
  %1520 = vmatprep.subr.mxu0 0.0
  %v1521 = vand.u32 %v138, 4294901760
  %v1522 = vsub.f32 %v138, %v1521
  %v1523 = vand.u32 %v1522, 4294901760
  %1524 = vmatpush1.msra.mxu0 %v1523
  %1525 = vmatprep.subr.mxu0 0.0
  %v1526 = vand.u32 %v137, 4294901760
  %v1527 = vsub.f32 %v137, %v1526
  %v1528 = vand.u32 %v1527, 4294901760
  %1529 = vmatpush1.msra.mxu0 %v1528
  %1530 = vmatprep.subr.mxu0 0.0
  %1531 = vmatpush2.msra.mxu0 0.0
  %1532 = vmatprep.subr.mxu0 0.0
  %1533 = vmatpush2.msra.mxu0 0.0
  %1534 = vmatprep.subr.mxu0 0.0
  %1535 = vmatpush2.msra.mxu0 0.0
  %1536 = vmatprep.subr.mxu0 0.0
  %1537 = vmatpush2.msra.mxu0 0.0
  %1538 = vmatprep.subr.mxu0 0.0
  %1539 = vmatpush2.msra.mxu0 0.0
  %1540 = vmatprep.subr.mxu0 0.0
  %1541 = vmatpush2.msra.mxu0 0.0
  %1542 = vmatprep.subr.mxu0 0.0
  %1543 = vmatpush2.msra.mxu0 0.0
  %1544 = vmatprep.subr.mxu0 0.0
  %1545 = vmatpush2.msra.mxu0 0.0
  %1546 = vmatprep.subr.mxu0 0.0
  %1547 = vmatpush2.msra.mxu0 0.0
  %1548 = vmatprep.subr.mxu0 0.0
  %1549 = vmatpush2.msra.mxu0 0.0
  %1550 = vmatprep.subr.mxu0 0.0
  %1551 = vmatpush2.msra.mxu0 0.0
  %1552 = vmatprep.subr.mxu0 0.0
  %1553 = vmatpush2.msra.mxu0 0.0
  %1554 = vmatprep.subr.mxu0 0.0
  %1555 = vmatpush2.msra.mxu0 0.0
  %1556 = vmatprep.subr.mxu0 0.0
  %1557 = vmatpush2.msra.mxu0 0.0
  %1558 = vmatprep.subr.mxu0 0.0
  %1559 = vmatpush2.msra.mxu0 0.0
  %1560 = vmatprep.subr.mxu0 0.0
  %1561 = vmatpush2.msra.mxu0 0.0
  %1562 = vmatprep.mubr.f32.mxu0 0.0
  %v1563 = vand.u32 %v103, 4294901760
  %1564 = vmatmul.mubr.f32.gmra.mxu0 %v1563
  %v1565 = vpop.f32.mrf.mxu0
  %v1566 = vadd.f32 %v1447, %v1565
  %v1567 = vpop.f32.mrf.mxu0
  %1568 = vdwg.mxu0
  %1569 = vmatprep.subr.mxu0 0.0
  %v1570 = vand.u32 %v152, 4294901760
  %1571 = vmatpush1.msra.mxu0 %v1570
  %1572 = vmatprep.subr.mxu0 0.0
  %v1573 = vand.u32 %v151, 4294901760
  %1574 = vmatpush1.msra.mxu0 %v1573
  %1575 = vmatprep.subr.mxu0 0.0
  %v1576 = vand.u32 %v150, 4294901760
  %1577 = vmatpush1.msra.mxu0 %v1576
  %1578 = vmatprep.subr.mxu0 0.0
  %v1579 = vand.u32 %v149, 4294901760
  %1580 = vmatpush1.msra.mxu0 %v1579
  %1581 = vmatprep.subr.mxu0 0.0
  %v1582 = vand.u32 %v148, 4294901760
  %1583 = vmatpush1.msra.mxu0 %v1582
  %1584 = vmatprep.subr.mxu0 0.0
  %v1585 = vand.u32 %v147, 4294901760
  %1586 = vmatpush1.msra.mxu0 %v1585
  %1587 = vmatprep.subr.mxu0 0.0
  %v1588 = vand.u32 %v146, 4294901760
  %1589 = vmatpush1.msra.mxu0 %v1588
  %1590 = vmatprep.subr.mxu0 0.0
  %v1591 = vand.u32 %v145, 4294901760
  %1592 = vmatpush1.msra.mxu0 %v1591
  %1593 = vmatprep.subr.mxu0 0.0
  %v1594 = vand.u32 %v144, 4294901760
  %1595 = vmatpush1.msra.mxu0 %v1594
  %1596 = vmatprep.subr.mxu0 0.0
  %v1597 = vand.u32 %v143, 4294901760
  %1598 = vmatpush1.msra.mxu0 %v1597
  %1599 = vmatprep.subr.mxu0 0.0
  %v1600 = vand.u32 %v142, 4294901760
  %1601 = vmatpush1.msra.mxu0 %v1600
  %1602 = vmatprep.subr.mxu0 0.0
  %v1603 = vand.u32 %v141, 4294901760
  %1604 = vmatpush1.msra.mxu0 %v1603
  %1605 = vmatprep.subr.mxu0 0.0
  %v1606 = vand.u32 %v140, 4294901760
  %1607 = vmatpush1.msra.mxu0 %v1606
  %1608 = vmatprep.subr.mxu0 0.0
  %v1609 = vand.u32 %v139, 4294901760
  %1610 = vmatpush1.msra.mxu0 %v1609
  %1611 = vmatprep.subr.mxu0 0.0
  %v1612 = vand.u32 %v138, 4294901760
  %1613 = vmatpush1.msra.mxu0 %v1612
  %1614 = vmatprep.subr.mxu0 0.0
  %v1615 = vand.u32 %v137, 4294901760
  %1616 = vmatpush1.msra.mxu0 %v1615
  %1617 = vmatprep.subr.mxu0 0.0
  %1618 = vmatpush2.msra.mxu0 0.0
  %1619 = vmatprep.subr.mxu0 0.0
  %1620 = vmatpush2.msra.mxu0 0.0
  %1621 = vmatprep.subr.mxu0 0.0
  %1622 = vmatpush2.msra.mxu0 0.0
  %1623 = vmatprep.subr.mxu0 0.0
  %1624 = vmatpush2.msra.mxu0 0.0
  %1625 = vmatprep.subr.mxu0 0.0
  %1626 = vmatpush2.msra.mxu0 0.0
  %1627 = vmatprep.subr.mxu0 0.0
  %1628 = vmatpush2.msra.mxu0 0.0
  %1629 = vmatprep.subr.mxu0 0.0
  %1630 = vmatpush2.msra.mxu0 0.0
  %1631 = vmatprep.subr.mxu0 0.0
  %1632 = vmatpush2.msra.mxu0 0.0
  %1633 = vmatprep.subr.mxu0 0.0
  %1634 = vmatpush2.msra.mxu0 0.0
  %1635 = vmatprep.subr.mxu0 0.0
  %1636 = vmatpush2.msra.mxu0 0.0
  %1637 = vmatprep.subr.mxu0 0.0
  %1638 = vmatpush2.msra.mxu0 0.0
  %1639 = vmatprep.subr.mxu0 0.0
  %1640 = vmatpush2.msra.mxu0 0.0
  %1641 = vmatprep.subr.mxu0 0.0
  %1642 = vmatpush2.msra.mxu0 0.0
  %1643 = vmatprep.subr.mxu0 0.0
  %1644 = vmatpush2.msra.mxu0 0.0
  %1645 = vmatprep.subr.mxu0 0.0
  %1646 = vmatpush2.msra.mxu0 0.0
  %1647 = vmatprep.subr.mxu0 0.0
  %1648 = vmatpush2.msra.mxu0 0.0
  %1649 = vmatprep.mubr.f32.mxu0 0.0
  %v1650 = vand.u32 %v103, 4294901760
  %1651 = vmatmul.mubr.f32.gmra.mxu0 %v1650
  %v1652 = vpop.f32.mrf.mxu0
  %v1653 = vadd.f32 %v1566, %v1652
  %v1654 = vpop.f32.mrf.mxu0
  %1655 = vdwg.mxu0
  %v1656 = vmul.f32 %v1653, 0.05
  %v1657 = vadd.f32 %v104, %v1656
  %1658 = vst [vmem:[%s4] sm:$0xff] %v1657
  // Predicated region
  $region22: #{model_forward.13} parent=0 // pred_check
    _
  $region23: #{model_forward.13} parent=0 // pred_check_branch
    %1660 = sbr.rel (0) target = $region25
  $region24: #{model_forward.13} parent=0 // pred_region
    _
  $region25: #{model_forward.13} parent=0 // pred_fallthru
    _
  // Predicated region
  $region26: #{model_forward.13} parent=0 // pred_check
    _
  $region27: #{model_forward.13} parent=0 // pred_check_branch
    %1662 = sbr.rel (0) target = $region29
  $region28: #{model_forward.13} parent=0 // pred_region
    _
  $region29: #{model_forward.13} parent=0 // pred_fallthru
    _

</llo_original>
